<compile_context>
chip_gen: v6e
topology: v6e:2x2x1
jax: 0.10.0
libtpu: 0.0.40
codegen_flags: <defaults>
</compile_context>

<pallas_src>
import jax
import jax.numpy as jnp
from jax.experimental import pallas as pl
from jax.experimental.pallas import tpu as pltpu


def _round_up(n, m):
    return ((n + m - 1) // m) * m


_MAX_SINGLE_TILE = 4096   # up to this batch, run one exact grid step
_MULTI_TILE = 2048        # otherwise tile batch in multiples of 2048 (8- and 128-aligned)


def q_mlp_kernel(x_ref, w1_ref, b1_ref, w2_ref, b2_ref, w3_ref, b3_ref, o_ref):
    # x_ref : [TB, xdim]   (un-padded feature dim; block last dim == full array dim)
    # w1_ref: [xdim, FP]   ([in, out] layout, out zero-padded to FP=128)
    # b1_ref: [1, FP]
    # w2_ref: [FP, FP]     ([in, out] layout, zero-padded)
    # b2_ref: [1, FP]
    # w3_ref: [UP, FP]     (PyTorch [out, in] layout, padded to 8 x 128)
    # b3_ref: [UP, 1]
    # o_ref : [UP, TB]     (transposed output tile; real values in [:udim, :])
    P = jax.lax.Precision.HIGHEST

    x = x_ref[...]
    h1 = jnp.maximum(
        jnp.dot(x, w1_ref[...], precision=P,
                preferred_element_type=jnp.float32) + b1_ref[...], 0.0)
    h2 = jnp.maximum(
        jnp.dot(h1, w2_ref[...], precision=P,
                preferred_element_type=jnp.float32) + b2_ref[...], 0.0)
    # Transposed last layer: [UP, TB] = w3_pad[UP, FP] . h2[TB, FP]^T
    o = jax.lax.dot_general(
        w3_ref[...], h2,
        dimension_numbers=(((1,), (1,)), ((), ())),
        precision=P, preferred_element_type=jnp.float32)
    o_ref[...] = o + b3_ref[...]


def _pack_params(params):
    """One-time re-layout of PyTorch-convention params (W:[out,in], b:[out])."""
    w1, b1, w2, b2, w3, b3 = [jnp.asarray(p, jnp.float32) for p in params]
    hdim, xdim = w1.shape
    udim = w3.shape[0]
    FP = _round_up(hdim, 128)   # lane-aligned hidden width (keep at 128 for hdim<=128)
    UP = _round_up(udim, 8)     # sublane-aligned output rows

    w1p = jnp.zeros((xdim, FP), jnp.float32).at[:, :hdim].set(w1.T)
    b1p = jnp.zeros((1, FP), jnp.float32).at[0, :hdim].set(b1.reshape(-1))
    w2p = jnp.zeros((FP, FP), jnp.float32).at[:hdim, :hdim].set(w2.T)
    b2p = jnp.zeros((1, FP), jnp.float32).at[0, :hdim].set(b2.reshape(-1))
    w3p = jnp.zeros((UP, FP), jnp.float32).at[:udim, :hdim].set(w3)   # keep [out, in]
    b3p = jnp.zeros((UP, 1), jnp.float32).at[:udim, 0].set(b3.reshape(-1))
    return (w1p, b1p, w2p, b2p, w3p, b3p), udim


def _forward_impl(x, packed, udim):
    w1p, b1p, w2p, b2p, w3p, b3p = packed
    B = x.shape[0]
    xdim = w1p.shape[0]
    FP = w1p.shape[1]
    UP = w3p.shape[0]

    if B <= _MAX_SINGLE_TILE:
        tb = _round_up(max(B, 8), 8)   # one exact grid step
        BP = tb
    else:
        tb = _MULTI_TILE               # lane-dense (8, tb) output blocks
        BP = _round_up(B, tb)

    xp = jnp.asarray(x, jnp.float32)
    if BP > B:
        xp = jnp.zeros((BP, xdim), jnp.float32).at[:B, :].set(xp)

    out_t = pl.pallas_call(
        q_mlp_kernel,
        out_shape=jax.ShapeDtypeStruct((UP, BP), jnp.float32),
        grid=(BP // tb,),
        in_specs=[
            pl.BlockSpec((tb, xdim), lambda i: (i, 0)),   # x: tiled over batch only
            pl.BlockSpec((xdim, FP), lambda i: (0, 0)),   # params: resident in VMEM
            pl.BlockSpec((1, FP), lambda i: (0, 0)),
            pl.BlockSpec((FP, FP), lambda i: (0, 0)),
            pl.BlockSpec((1, FP), lambda i: (0, 0)),
            pl.BlockSpec((UP, FP), lambda i: (0, 0)),
            pl.BlockSpec((UP, 1), lambda i: (0, 0)),
        ],
        out_specs=pl.BlockSpec((UP, tb), lambda i: (0, i)),  # transposed output
        compiler_params=pltpu.CompilerParams(
            dimension_semantics=("parallel",)),
    )(xp, w1p, b1p, w2p, b2p, w3p, b3p)

    # Un-transpose and strip padding (fuses into the surrounding jit graph).
    return out_t[:udim, :B].T


def make_q_t_forward(params):
    """Pack params once, return a jitted forward(x) matching PyTorch q_t.forward."""
    packed, udim = _pack_params(params)
    fwd = jax.jit(lambda x, p: _forward_impl(x, p, udim))
    return lambda x: fwd(x, packed)


def init_params(key, xdim, udim, hdim):
    """Deterministic init mimicking PyTorch Linear's uniform(-1/sqrt(fan_in), ...)."""
    ks = jax.random.split(key, 6)

    def lin(kw, kb, fan_in, fan_out):
        bound = float(fan_in) ** -0.5
        w = jax.random.uniform(kw, (fan_out, fan_in), jnp.float32, -bound, bound)
        b = jax.random.uniform(kb, (fan_out,), jnp.float32, -bound, bound)
        return w, b

    w1, b1 = lin(ks[0], ks[1], xdim, hdim)
    w2, b2 = lin(ks[2], ks[3], hdim, hdim)
    w3, b3 = lin(ks[4], ks[5], hdim, udim)
    return (w1, b1, w2, b2, w3, b3)


def reference_forward(x, params):
    w1, b1, w2, b2, w3, b3 = params
    P = jax.lax.Precision.HIGHEST
    h1 = jnp.maximum(jnp.dot(x, w1.T, precision=P) + b1, 0.0)
    h2 = jnp.maximum(jnp.dot(h1, w2.T, precision=P) + b2, 0.0)
    return jnp.dot(h2, w3.T, precision=P) + b3


if __name__ == "__main__":
    # CartPole-like sizes: xdim=4 (state), udim=2 (actions), hdim=16 (default)
    B, xdim, udim, hdim = 8, 4, 2, 16

    key = jax.random.PRNGKey(0)
    k_x, k_p, k_x2, k_x3 = jax.random.split(key, 4)
    params = init_params(k_p, xdim, udim, hdim)
    forward = make_q_t_forward(params)

    x = jax.random.normal(k_x, (B, xdim), jnp.float32)
    out = jax.block_until_ready(forward(x))
    ref = reference_forward(x, params)
    assert out.shape == (B, udim)
    assert jnp.allclose(out, ref, atol=1e-5, rtol=1e-5)

    # Medium batch: still one exact grid step (BP = round_up(300, 8) = 304).
    B2 = 300
    x2 = jax.random.normal(k_x2, (B2, xdim), jnp.float32)
    out2 = jax.block_until_ready(forward(x2))
    ref2 = reference_forward(x2, params)
    assert out2.shape == (B2, udim)
    assert jnp.allclose(out2, ref2, atol=1e-5, rtol=1e-5)

    # Large batch: exercises the tiled multi-step grid path (tb=2048, grid=3).
    B3 = 5000
    x3 = jax.random.normal(k_x3, (B3, xdim), jnp.float32)
    out3 = jax.block_until_ready(forward(x3))
    ref3 = reference_forward(x3, params)
    assert out3.shape == (B3, udim)
    assert jnp.allclose(out3, ref3, atol=1e-5, rtol=1e-5)

    print("KERNEL_OK")
</pallas_src>

<mosaic_0001>
module attributes {stable_mosaic.version = 11 : i64} {
  func.func @q_mlp_kernel(%arg0: i32, %arg1: memref<8x4xf32, #tpu.memory_space<vmem>>, %arg2: memref<4x128xf32, #tpu.memory_space<vmem>>, %arg3: memref<1x128xf32, #tpu.memory_space<vmem>>, %arg4: memref<128x128xf32, #tpu.memory_space<vmem>>, %arg5: memref<1x128xf32, #tpu.memory_space<vmem>>, %arg6: memref<8x128xf32, #tpu.memory_space<vmem>>, %arg7: memref<8x1xf32, #tpu.memory_space<vmem>>, %arg8: memref<8x8xf32, #tpu.memory_space<vmem>>) attributes {dimension_semantics = [#tpu.dimension_semantics<parallel>], iteration_bounds = array<i64: 1>, scalar_prefetch = 0 : i64, scratch_operands = 0 : i64, tpu.core_type = #tpu.core_type<tc>, window_params = [{transform_indices = @transform_0, window_bounds = array<i64: 8, 4>}, {pipeline_mode = #tpu.pipeline_mode<synchronous>, transform_indices = @transform_1, window_bounds = array<i64: 4, 128>}, {pipeline_mode = #tpu.pipeline_mode<synchronous>, transform_indices = @transform_2, window_bounds = array<i64: 1, 128>}, {pipeline_mode = #tpu.pipeline_mode<synchronous>, transform_indices = @transform_3, window_bounds = array<i64: 128, 128>}, {pipeline_mode = #tpu.pipeline_mode<synchronous>, transform_indices = @transform_4, window_bounds = array<i64: 1, 128>}, {pipeline_mode = #tpu.pipeline_mode<synchronous>, transform_indices = @transform_5, window_bounds = array<i64: 8, 128>}, {pipeline_mode = #tpu.pipeline_mode<synchronous>, transform_indices = @transform_6, window_bounds = array<i64: 8, 1>}, {transform_indices = @transform_7, window_bounds = array<i64: 8, 8>}]} {
    %c0 = arith.constant 0 : index
    %c0_0 = arith.constant 0 : index
    %0 = vector.load %arg1[%c0, %c0_0] : memref<8x4xf32, #tpu.memory_space<vmem>>, vector<8x4xf32>
    %c0_1 = arith.constant 0 : index
    %c0_2 = arith.constant 0 : index
    %1 = vector.load %arg2[%c0_1, %c0_2] : memref<4x128xf32, #tpu.memory_space<vmem>>, vector<4x128xf32>
    %cst = arith.constant dense<0.000000e+00> : vector<8x128xf32>
    %2 = tpu.matmul %0, %1, %cst {dimension_numbers = #tpu.dot_dimension_numbers<[1], [0], [0], [1], [0, 0, 1, 1], [], []>, precision = #tpu.contract_precision<fp32>} : vector<8x4xf32>, vector<4x128xf32>, vector<8x128xf32> -> vector<8x128xf32>
    %c0_3 = arith.constant 0 : index
    %c0_4 = arith.constant 0 : index
    %3 = vector.load %arg3[%c0_3, %c0_4] : memref<1x128xf32, #tpu.memory_space<vmem>>, vector<1x128xf32>
    %4 = vector.broadcast %3 : vector<1x128xf32> to vector<8x128xf32>
    %5 = arith.addf %2, %4 : vector<8x128xf32>
    %cst_5 = arith.constant 0.000000e+00 : f32
    %6 = vector.broadcast %cst_5 : f32 to vector<8x128xf32>
    %7 = arith.maximumf %5, %6 : vector<8x128xf32>
    %c0_6 = arith.constant 0 : index
    %c0_7 = arith.constant 0 : index
    %8 = vector.load %arg4[%c0_6, %c0_7] : memref<128x128xf32, #tpu.memory_space<vmem>>, vector<128x128xf32>
    %cst_8 = arith.constant dense<0.000000e+00> : vector<8x128xf32>
    %9 = tpu.matmul %7, %8, %cst_8 {dimension_numbers = #tpu.dot_dimension_numbers<[1], [0], [0], [1], [0, 0, 1, 1], [], []>, precision = #tpu.contract_precision<fp32>} : vector<8x128xf32>, vector<128x128xf32>, vector<8x128xf32> -> vector<8x128xf32>
    %c0_9 = arith.constant 0 : index
    %c0_10 = arith.constant 0 : index
    %10 = vector.load %arg5[%c0_9, %c0_10] : memref<1x128xf32, #tpu.memory_space<vmem>>, vector<1x128xf32>
    %11 = vector.broadcast %10 : vector<1x128xf32> to vector<8x128xf32>
    %12 = arith.addf %9, %11 : vector<8x128xf32>
    %cst_11 = arith.constant 0.000000e+00 : f32
    %13 = vector.broadcast %cst_11 : f32 to vector<8x128xf32>
    %14 = arith.maximumf %12, %13 : vector<8x128xf32>
    %c0_12 = arith.constant 0 : index
    %c0_13 = arith.constant 0 : index
    %15 = vector.load %arg6[%c0_12, %c0_13] : memref<8x128xf32, #tpu.memory_space<vmem>>, vector<8x128xf32>
    %cst_14 = arith.constant dense<0.000000e+00> : vector<8x8xf32>
    %16 = tpu.matmul %15, %14, %cst_14 {dimension_numbers = #tpu.dot_dimension_numbers<[1], [1], [0], [0], [0, 0, 1, 0], [], []>, precision = #tpu.contract_precision<fp32>} : vector<8x128xf32>, vector<8x128xf32>, vector<8x8xf32> -> vector<8x8xf32>
    %c0_15 = arith.constant 0 : index
    %c0_16 = arith.constant 0 : index
    %17 = vector.load %arg7[%c0_15, %c0_16] : memref<8x1xf32, #tpu.memory_space<vmem>>, vector<8x1xf32>
    %18 = vector.broadcast %17 : vector<8x1xf32> to vector<8x8xf32>
    %19 = arith.addf %16, %18 : vector<8x8xf32>
    %c0_17 = arith.constant 0 : index
    %c0_18 = arith.constant 0 : index
    %20 = vector.load %arg8[%c0_17, %c0_18] : memref<8x8xf32, #tpu.memory_space<vmem>>, vector<8x8xf32>
    tpu.vector_store %arg8[%c0_17, %c0_18], %19 {strides = array<i32>} : memref<8x8xf32, #tpu.memory_space<vmem>>, vector<8x8xf32>,
    return
  }
  func.func @transform_0(%arg0: i32) -> (i32, i32) {
    %c0_i32 = arith.constant 0 : i32
    %c0_i32_0 = arith.constant 0 : i32
    return %arg0, %c0_i32 : i32, i32
  }
  func.func @transform_1(%arg0: i32) -> (i32, i32) {
    %c0_i32 = arith.constant 0 : i32
    %c0_i32_0 = arith.constant 0 : i32
    %c0_i32_1 = arith.constant 0 : i32
    return %c0_i32, %c0_i32_0 : i32, i32
  }
  func.func @transform_2(%arg0: i32) -> (i32, i32) {
    %c0_i32 = arith.constant 0 : i32
    %c0_i32_0 = arith.constant 0 : i32
    %c0_i32_1 = arith.constant 0 : i32
    return %c0_i32, %c0_i32_0 : i32, i32
  }
  func.func @transform_3(%arg0: i32) -> (i32, i32) {
    %c0_i32 = arith.constant 0 : i32
    %c0_i32_0 = arith.constant 0 : i32
    %c0_i32_1 = arith.constant 0 : i32
    return %c0_i32, %c0_i32_0 : i32, i32
  }
  func.func @transform_4(%arg0: i32) -> (i32, i32) {
    %c0_i32 = arith.constant 0 : i32
    %c0_i32_0 = arith.constant 0 : i32
    %c0_i32_1 = arith.constant 0 : i32
    return %c0_i32, %c0_i32_0 : i32, i32
  }
  func.func @transform_5(%arg0: i32) -> (i32, i32) {
    %c0_i32 = arith.constant 0 : i32
    %c0_i32_0 = arith.constant 0 : i32
    %c0_i32_1 = arith.constant 0 : i32
    return %c0_i32, %c0_i32_0 : i32, i32
  }
  func.func @transform_6(%arg0: i32) -> (i32, i32) {
    %c0_i32 = arith.constant 0 : i32
    %c0_i32_0 = arith.constant 0 : i32
    %c0_i32_1 = arith.constant 0 : i32
    return %c0_i32, %c0_i32_0 : i32, i32
  }
  func.func @transform_7(%arg0: i32) -> (i32, i32) {
    %c0_i32 = arith.constant 0 : i32
    %c0_i32_0 = arith.constant 0 : i32
    return %c0_i32, %arg0 : i32, i32
  }
}

</mosaic_0001>

<llo_original>
// kernel: _lambda_.1
$region0: #{_lambda_.1}
  #allocation0 [shape = 'u32[]', space=smem, size = 0x4, offset = 0x4, fixed_abs, tag = 'smem constant byte address 0x4 - core index']
  #allocation1 [shape = 'u32[144,128]{1,0:T(1,128)}', space=vmem, size = 0x12000, scoped, tag = 'internal scratch']
  %s0 = inlined_call_operand.vmem [shape: f32[8,4], index: 0, kind: input, shape index: {}]
  %s1 = inlined_call_operand.vmem [shape: f32[4,128], index: 1, kind: input, shape index: {}]
  %s2 = inlined_call_operand.vmem [shape: f32[1,128], index: 2, kind: input, shape index: {}]
  %s3 = inlined_call_operand.hbm [shape: f32[128,128], index: 3, kind: input, shape index: {}]
  %s4 = inlined_call_operand.vmem [shape: f32[1,128], index: 4, kind: input, shape index: {}]
  %s5 = inlined_call_operand.vmem [shape: f32[8,128], index: 5, kind: input, shape index: {}]
  %s6 = inlined_call_operand.vmem [shape: f32[8,1], index: 6, kind: input, shape index: {}]
  %s7 = inlined_call_operand.vmem [shape: f32[8,8], index: 7, kind: output, shape index: {}]
  %s8 = sld [smem:[#allocation0]]
  $region42: #{_lambda_.1} parent=0
    _
  %s10 = ssub.s32 1, %s8
  %s11 = scalar_select 0, %s10, %s8
  $region1: #{_lambda_.1} parent=0
    #allocation2 [shape = 'u8[65536]{0}', space=vmem, size = 0x10000, scoped, tag = 'input window, operand 3, single buffered']
    #allocation3 [shape = 's32[1]{0}', space=sflag, size = 0x4, scoped, tag = 'scoped memory for _lambda_.1']
    %12 = vsyncpa [#allocation3], 0
    // Predicated region
    $region2: #{_lambda_.1} parent=1 // pred_check
      _
    $region3: #{_lambda_.1} parent=1 // pred_check_branch
      %14 = sbr.rel (0) target = $region5
    $region4: #{_lambda_.1} parent=1 // pred_region
      _
    $region5: #{_lambda_.1} parent=1 // pred_fallthru
      _
    // Predicated region
    $region6: #{_lambda_.1} parent=1 // pred_check
      _
    $region7: #{_lambda_.1} parent=1 // pred_check_branch
      %16 = sbr.rel (0) target = $region9
    $region8: #{_lambda_.1} parent=1 // pred_region
      _
    $region9: #{_lambda_.1} parent=1 // pred_fallthru
      _
    // Predicated region
    $region10: #{_lambda_.1} parent=1 // pred_check
      _
    $region11: #{_lambda_.1} parent=1 // pred_check_branch
      %18 = sbr.rel (0) target = $region13
    $region12: #{_lambda_.1} parent=1 // pred_region
      _
    $region13: #{_lambda_.1} parent=1 // pred_fallthru
      _
    // Predicated region
    $region14: #{_lambda_.1} parent=1 // pred_check
      _
    $region15: #{_lambda_.1} parent=1 // pred_check_branch
      %20 = sbr.rel (0) target = $region17
    $region16: #{_lambda_.1} parent=1 // pred_region
      %s22 = ssub.s32 2048, 2048
      %23 = vsyncadd [#allocation3], %s22
      %s24 = sshll.u32 [#allocation2], 4
      %s25 = int_to_ptr.vmem [resolvable:$true] %s24
      %30 = dma.hbm_to_vmem [thread:$0]  %s3, 2048, %s25, [#allocation3], 128, 128, 8
    $region17: #{_lambda_.1} parent=1 // pred_fallthru
      _
    // Predicated region
    $region18: #{_lambda_.1} parent=1 // pred_check
      _
    $region19: #{_lambda_.1} parent=1 // pred_check_branch
      %32 = sbr.rel (0) target = $region21
    $region20: #{_lambda_.1} parent=1 // pred_region
      _
    $region21: #{_lambda_.1} parent=1 // pred_fallthru
      _
    // Predicated region
    $region22: #{_lambda_.1} parent=1 // pred_check
      _
    $region23: #{_lambda_.1} parent=1 // pred_check_branch
      %34 = sbr.rel (0) target = $region25
    $region24: #{_lambda_.1} parent=1 // pred_region
      _
    $region25: #{_lambda_.1} parent=1 // pred_fallthru
      _
    // Predicated region
    $region26: #{_lambda_.1} parent=1 // pred_check
      _
    $region27: #{_lambda_.1} parent=1 // pred_check_branch
      %36 = sbr.rel (0) target = $region29
    $region28: #{_lambda_.1} parent=1 // pred_region
      _
    $region29: #{_lambda_.1} parent=1 // pred_fallthru
      _
    // Predicated region
    $region30: #{_lambda_.1} parent=1 // pred_check
      _
    $region31: #{_lambda_.1} parent=1 // pred_check_branch
      %38 = sbr.rel (0) target = $region33
    $region32: #{_lambda_.1} parent=1 // pred_region
      %39 = dma.done [#allocation3], 2048
    $region33: #{_lambda_.1} parent=1 // pred_fallthru
      _
    %v40 = vld [vmem:[%s0] sm:$0xff]
    %v41 = vld [vmem:[%s1] sm:$0xf]
    %v42 = vld [vmem:[%s2] sm:$0x1]
    %v44 = vlaneseq
    %v45 = vshrl.u32 %v44, 7
    %v46 = vsub.s32 0, %v45
    %v47 = vrot.slane %v42, %v46
    %vm49 = vcmask 31744
    %v51 = vsel %vm49, %v40, 0
    %vm53 = vcmask 1043456
    %v55 = vsel %vm53, %v41, 0
    %57 = vmatprep.subr.mxu0 0.0
    %58 = vmatpush1.msra.mxu0 0.0
    %59 = vmatprep.subr.mxu0 0.0
    %60 = vmatpush1.msra.mxu0 0.0
    %61 = vmatprep.subr.mxu0 0.0
    %62 = vmatpush1.msra.mxu0 0.0
    %63 = vmatprep.subr.mxu0 0.0
    %64 = vmatpush1.msra.mxu0 0.0
    %65 = vmatprep.subr.mxu0 0.0
    %66 = vmatpush1.msra.mxu0 0.0
    %67 = vmatprep.subr.mxu0 0.0
    %68 = vmatpush1.msra.mxu0 0.0
    %69 = vmatprep.subr.mxu0 0.0
    %70 = vmatpush1.msra.mxu0 0.0
    %71 = vmatprep.subr.mxu0 0.0
    %72 = vmatpush1.msra.mxu0 0.0
    %73 = vmatprep.subr.mxu0 0.0
    %74 = vmatpush1.msra.mxu0 0.0
    %75 = vmatprep.subr.mxu0 0.0
    %76 = vmatpush1.msra.mxu0 0.0
    %77 = vmatprep.subr.mxu0 0.0
    %78 = vmatpush1.msra.mxu0 0.0
    %79 = vmatprep.subr.mxu0 0.0
    %80 = vmatpush1.msra.mxu0 0.0
    %81 = vmatprep.subr.mxu0 0.0
    %82 = vmatpush1.msra.mxu0 0.0
    %83 = vmatprep.subr.mxu0 0.0
    %84 = vmatpush1.msra.mxu0 0.0
    %85 = vmatprep.subr.mxu0 0.0
    %86 = vmatpush1.msra.mxu0 0.0
    %87 = vmatprep.subr.mxu0 0.0
    %v88 = vand.u32 %v55, 4294901760
    %89 = vmatpush1.msra.mxu0 %v88
    %90 = vmatprep.subr.mxu0 0.0
    %91 = vmatpush2.msra.mxu0 0.0
    %92 = vmatprep.subr.mxu0 0.0
    %93 = vmatpush2.msra.mxu0 0.0
    %94 = vmatprep.subr.mxu0 0.0
    %95 = vmatpush2.msra.mxu0 0.0
    %96 = vmatprep.subr.mxu0 0.0
    %97 = vmatpush2.msra.mxu0 0.0
    %98 = vmatprep.subr.mxu0 0.0
    %99 = vmatpush2.msra.mxu0 0.0
    %100 = vmatprep.subr.mxu0 0.0
    %101 = vmatpush2.msra.mxu0 0.0
    %102 = vmatprep.subr.mxu0 0.0
    %103 = vmatpush2.msra.mxu0 0.0
    %104 = vmatprep.subr.mxu0 0.0
    %105 = vmatpush2.msra.mxu0 0.0
    %106 = vmatprep.subr.mxu0 0.0
    %107 = vmatpush2.msra.mxu0 0.0
    %108 = vmatprep.subr.mxu0 0.0
    %109 = vmatpush2.msra.mxu0 0.0
    %110 = vmatprep.subr.mxu0 0.0
    %111 = vmatpush2.msra.mxu0 0.0
    %112 = vmatprep.subr.mxu0 0.0
    %113 = vmatpush2.msra.mxu0 0.0
    %114 = vmatprep.subr.mxu0 0.0
    %115 = vmatpush2.msra.mxu0 0.0
    %116 = vmatprep.subr.mxu0 0.0
    %117 = vmatpush2.msra.mxu0 0.0
    %118 = vmatprep.subr.mxu0 0.0
    %119 = vmatpush2.msra.mxu0 0.0
    %120 = vmatprep.subr.mxu0 0.0
    %121 = vmatpush2.msra.mxu0 0.0
    %122 = vmatprep.mubr.f32.mxu0 0.0
    %v123 = vand.u32 %v51, 4294901760
    %v124 = vsub.f32 %v51, %v123
    %v125 = vand.u32 %v124, 4294901760
    %v126 = vsub.f32 %v124, %v125
    %v127 = vand.u32 %v126, 4294901760
    %128 = vmatmul.mubr.f32.gmra.mxu0 %v127
    %v129 = vpop.f32.mrf.mxu0
    %v130 = vadd.f32 %v47, %v129
    %v131 = vpop.f32.mrf.mxu0
    %132 = vdwg.mxu0
    %133 = vmatprep.subr.mxu0 0.0
    %134 = vmatpush1.msra.mxu0 0.0
    %135 = vmatprep.subr.mxu0 0.0
    %136 = vmatpush1.msra.mxu0 0.0
    %137 = vmatprep.subr.mxu0 0.0
    %138 = vmatpush1.msra.mxu0 0.0
    %139 = vmatprep.subr.mxu0 0.0
    %140 = vmatpush1.msra.mxu0 0.0
    %141 = vmatprep.subr.mxu0 0.0
    %142 = vmatpush1.msra.mxu0 0.0
    %143 = vmatprep.subr.mxu0 0.0
    %144 = vmatpush1.msra.mxu0 0.0
    %145 = vmatprep.subr.mxu0 0.0
    %146 = vmatpush1.msra.mxu0 0.0
    %147 = vmatprep.subr.mxu0 0.0
    %148 = vmatpush1.msra.mxu0 0.0
    %149 = vmatprep.subr.mxu0 0.0
    %150 = vmatpush1.msra.mxu0 0.0
    %151 = vmatprep.subr.mxu0 0.0
    %152 = vmatpush1.msra.mxu0 0.0
    %153 = vmatprep.subr.mxu0 0.0
    %154 = vmatpush1.msra.mxu0 0.0
    %155 = vmatprep.subr.mxu0 0.0
    %156 = vmatpush1.msra.mxu0 0.0
    %157 = vmatprep.subr.mxu0 0.0
    %158 = vmatpush1.msra.mxu0 0.0
    %159 = vmatprep.subr.mxu0 0.0
    %160 = vmatpush1.msra.mxu0 0.0
    %161 = vmatprep.subr.mxu0 0.0
    %162 = vmatpush1.msra.mxu0 0.0
    %163 = vmatprep.subr.mxu0 0.0
    %v164 = vand.u32 %v55, 4294901760
    %v165 = vsub.f32 %v55, %v164
    %v166 = vand.u32 %v165, 4294901760
    %v167 = vsub.f32 %v165, %v166
    %v168 = vand.u32 %v167, 4294901760
    %169 = vmatpush1.msra.mxu0 %v168
    %170 = vmatprep.subr.mxu0 0.0
    %171 = vmatpush2.msra.mxu0 0.0
    %172 = vmatprep.subr.mxu0 0.0
    %173 = vmatpush2.msra.mxu0 0.0
    %174 = vmatprep.subr.mxu0 0.0
    %175 = vmatpush2.msra.mxu0 0.0
    %176 = vmatprep.subr.mxu0 0.0
    %177 = vmatpush2.msra.mxu0 0.0
    %178 = vmatprep.subr.mxu0 0.0
    %179 = vmatpush2.msra.mxu0 0.0
    %180 = vmatprep.subr.mxu0 0.0
    %181 = vmatpush2.msra.mxu0 0.0
    %182 = vmatprep.subr.mxu0 0.0
    %183 = vmatpush2.msra.mxu0 0.0
    %184 = vmatprep.subr.mxu0 0.0
    %185 = vmatpush2.msra.mxu0 0.0
    %186 = vmatprep.subr.mxu0 0.0
    %187 = vmatpush2.msra.mxu0 0.0
    %188 = vmatprep.subr.mxu0 0.0
    %189 = vmatpush2.msra.mxu0 0.0
    %190 = vmatprep.subr.mxu0 0.0
    %191 = vmatpush2.msra.mxu0 0.0
    %192 = vmatprep.subr.mxu0 0.0
    %193 = vmatpush2.msra.mxu0 0.0
    %194 = vmatprep.subr.mxu0 0.0
    %195 = vmatpush2.msra.mxu0 0.0
    %196 = vmatprep.subr.mxu0 0.0
    %197 = vmatpush2.msra.mxu0 0.0
    %198 = vmatprep.subr.mxu0 0.0
    %199 = vmatpush2.msra.mxu0 0.0
    %200 = vmatprep.subr.mxu0 0.0
    %201 = vmatpush2.msra.mxu0 0.0
    %202 = vmatprep.mubr.f32.mxu0 0.0
    %v203 = vand.u32 %v51, 4294901760
    %204 = vmatmul.mubr.f32.gmra.mxu0 %v203
    %v205 = vpop.f32.mrf.mxu0
    %v206 = vadd.f32 %v130, %v205
    %v207 = vpop.f32.mrf.mxu0
    %208 = vdwg.mxu0
    %209 = vmatprep.subr.mxu0 0.0
    %210 = vmatpush1.msra.mxu0 0.0
    %211 = vmatprep.subr.mxu0 0.0
    %212 = vmatpush1.msra.mxu0 0.0
    %213 = vmatprep.subr.mxu0 0.0
    %214 = vmatpush1.msra.mxu0 0.0
    %215 = vmatprep.subr.mxu0 0.0
    %216 = vmatpush1.msra.mxu0 0.0
    %217 = vmatprep.subr.mxu0 0.0
    %218 = vmatpush1.msra.mxu0 0.0
    %219 = vmatprep.subr.mxu0 0.0
    %220 = vmatpush1.msra.mxu0 0.0
    %221 = vmatprep.subr.mxu0 0.0
    %222 = vmatpush1.msra.mxu0 0.0
    %223 = vmatprep.subr.mxu0 0.0
    %224 = vmatpush1.msra.mxu0 0.0
    %225 = vmatprep.subr.mxu0 0.0
    %226 = vmatpush1.msra.mxu0 0.0
    %227 = vmatprep.subr.mxu0 0.0
    %228 = vmatpush1.msra.mxu0 0.0
    %229 = vmatprep.subr.mxu0 0.0
    %230 = vmatpush1.msra.mxu0 0.0
    %231 = vmatprep.subr.mxu0 0.0
    %232 = vmatpush1.msra.mxu0 0.0
    %233 = vmatprep.subr.mxu0 0.0
    %234 = vmatpush1.msra.mxu0 0.0
    %235 = vmatprep.subr.mxu0 0.0
    %236 = vmatpush1.msra.mxu0 0.0
    %237 = vmatprep.subr.mxu0 0.0
    %238 = vmatpush1.msra.mxu0 0.0
    %239 = vmatprep.subr.mxu0 0.0
    %v240 = vand.u32 %v55, 4294901760
    %v241 = vsub.f32 %v55, %v240
    %242 = vmatpush1.msra.mxu0 %v241
    %243 = vmatprep.subr.mxu0 0.0
    %244 = vmatpush2.msra.mxu0 0.0
    %245 = vmatprep.subr.mxu0 0.0
    %246 = vmatpush2.msra.mxu0 0.0
    %247 = vmatprep.subr.mxu0 0.0
    %248 = vmatpush2.msra.mxu0 0.0
    %249 = vmatprep.subr.mxu0 0.0
    %250 = vmatpush2.msra.mxu0 0.0
    %251 = vmatprep.subr.mxu0 0.0
    %252 = vmatpush2.msra.mxu0 0.0
    %253 = vmatprep.subr.mxu0 0.0
    %254 = vmatpush2.msra.mxu0 0.0
    %255 = vmatprep.subr.mxu0 0.0
    %256 = vmatpush2.msra.mxu0 0.0
    %257 = vmatprep.subr.mxu0 0.0
    %258 = vmatpush2.msra.mxu0 0.0
    %259 = vmatprep.subr.mxu0 0.0
    %260 = vmatpush2.msra.mxu0 0.0
    %261 = vmatprep.subr.mxu0 0.0
    %262 = vmatpush2.msra.mxu0 0.0
    %263 = vmatprep.subr.mxu0 0.0
    %264 = vmatpush2.msra.mxu0 0.0
    %265 = vmatprep.subr.mxu0 0.0
    %266 = vmatpush2.msra.mxu0 0.0
    %267 = vmatprep.subr.mxu0 0.0
    %268 = vmatpush2.msra.mxu0 0.0
    %269 = vmatprep.subr.mxu0 0.0
    %270 = vmatpush2.msra.mxu0 0.0
    %271 = vmatprep.subr.mxu0 0.0
    %272 = vmatpush2.msra.mxu0 0.0
    %273 = vmatprep.subr.mxu0 0.0
    %274 = vmatpush2.msra.mxu0 0.0
    %275 = vmatprep.mubr.f32.mxu0 0.0
    %v276 = vand.u32 %v51, 4294901760
    %v277 = vsub.f32 %v51, %v276
    %278 = vmatmul.mubr.f32.gmra.mxu0 %v277
    %v279 = vpop.f32.mrf.mxu0
    %v280 = vadd.f32 %v206, %v279
    %v281 = vpop.f32.mrf.mxu0
    %282 = vdwg.mxu0
    %283 = vmatprep.subr.mxu0 0.0
    %284 = vmatpush1.msra.mxu0 0.0
    %285 = vmatprep.subr.mxu0 0.0
    %286 = vmatpush1.msra.mxu0 0.0
    %287 = vmatprep.subr.mxu0 0.0
    %288 = vmatpush1.msra.mxu0 0.0
    %289 = vmatprep.subr.mxu0 0.0
    %290 = vmatpush1.msra.mxu0 0.0
    %291 = vmatprep.subr.mxu0 0.0
    %292 = vmatpush1.msra.mxu0 0.0
    %293 = vmatprep.subr.mxu0 0.0
    %294 = vmatpush1.msra.mxu0 0.0
    %295 = vmatprep.subr.mxu0 0.0
    %296 = vmatpush1.msra.mxu0 0.0
    %297 = vmatprep.subr.mxu0 0.0
    %298 = vmatpush1.msra.mxu0 0.0
    %299 = vmatprep.subr.mxu0 0.0
    %300 = vmatpush1.msra.mxu0 0.0
    %301 = vmatprep.subr.mxu0 0.0
    %302 = vmatpush1.msra.mxu0 0.0
    %303 = vmatprep.subr.mxu0 0.0
    %304 = vmatpush1.msra.mxu0 0.0
    %305 = vmatprep.subr.mxu0 0.0
    %306 = vmatpush1.msra.mxu0 0.0
    %307 = vmatprep.subr.mxu0 0.0
    %308 = vmatpush1.msra.mxu0 0.0
    %309 = vmatprep.subr.mxu0 0.0
    %310 = vmatpush1.msra.mxu0 0.0
    %311 = vmatprep.subr.mxu0 0.0
    %312 = vmatpush1.msra.mxu0 0.0
    %313 = vmatprep.subr.mxu0 0.0
    %v314 = vand.u32 %v55, 4294901760
    %315 = vmatpush1.msra.mxu0 %v314
    %316 = vmatprep.subr.mxu0 0.0
    %317 = vmatpush2.msra.mxu0 0.0
    %318 = vmatprep.subr.mxu0 0.0
    %319 = vmatpush2.msra.mxu0 0.0
    %320 = vmatprep.subr.mxu0 0.0
    %321 = vmatpush2.msra.mxu0 0.0
    %322 = vmatprep.subr.mxu0 0.0
    %323 = vmatpush2.msra.mxu0 0.0
    %324 = vmatprep.subr.mxu0 0.0
    %325 = vmatpush2.msra.mxu0 0.0
    %326 = vmatprep.subr.mxu0 0.0
    %327 = vmatpush2.msra.mxu0 0.0
    %328 = vmatprep.subr.mxu0 0.0
    %329 = vmatpush2.msra.mxu0 0.0
    %330 = vmatprep.subr.mxu0 0.0
    %331 = vmatpush2.msra.mxu0 0.0
    %332 = vmatprep.subr.mxu0 0.0
    %333 = vmatpush2.msra.mxu0 0.0
    %334 = vmatprep.subr.mxu0 0.0
    %335 = vmatpush2.msra.mxu0 0.0
    %336 = vmatprep.subr.mxu0 0.0
    %337 = vmatpush2.msra.mxu0 0.0
    %338 = vmatprep.subr.mxu0 0.0
    %339 = vmatpush2.msra.mxu0 0.0
    %340 = vmatprep.subr.mxu0 0.0
    %341 = vmatpush2.msra.mxu0 0.0
    %342 = vmatprep.subr.mxu0 0.0
    %343 = vmatpush2.msra.mxu0 0.0
    %344 = vmatprep.subr.mxu0 0.0
    %345 = vmatpush2.msra.mxu0 0.0
    %346 = vmatprep.subr.mxu0 0.0
    %347 = vmatpush2.msra.mxu0 0.0
    %348 = vmatprep.mubr.f32.mxu0 0.0
    %v349 = vand.u32 %v51, 4294901760
    %v350 = vsub.f32 %v51, %v349
    %v351 = vand.u32 %v350, 4294901760
    %352 = vmatmul.mubr.f32.gmra.mxu0 %v351
    %v353 = vpop.f32.mrf.mxu0
    %v354 = vadd.f32 %v280, %v353
    %v355 = vpop.f32.mrf.mxu0
    %356 = vdwg.mxu0
    %357 = vmatprep.subr.mxu0 0.0
    %358 = vmatpush1.msra.mxu0 0.0
    %359 = vmatprep.subr.mxu0 0.0
    %360 = vmatpush1.msra.mxu0 0.0
    %361 = vmatprep.subr.mxu0 0.0
    %362 = vmatpush1.msra.mxu0 0.0
    %363 = vmatprep.subr.mxu0 0.0
    %364 = vmatpush1.msra.mxu0 0.0
    %365 = vmatprep.subr.mxu0 0.0
    %366 = vmatpush1.msra.mxu0 0.0
    %367 = vmatprep.subr.mxu0 0.0
    %368 = vmatpush1.msra.mxu0 0.0
    %369 = vmatprep.subr.mxu0 0.0
    %370 = vmatpush1.msra.mxu0 0.0
    %371 = vmatprep.subr.mxu0 0.0
    %372 = vmatpush1.msra.mxu0 0.0
    %373 = vmatprep.subr.mxu0 0.0
    %374 = vmatpush1.msra.mxu0 0.0
    %375 = vmatprep.subr.mxu0 0.0
    %376 = vmatpush1.msra.mxu0 0.0
    %377 = vmatprep.subr.mxu0 0.0
    %378 = vmatpush1.msra.mxu0 0.0
    %379 = vmatprep.subr.mxu0 0.0
    %380 = vmatpush1.msra.mxu0 0.0
    %381 = vmatprep.subr.mxu0 0.0
    %382 = vmatpush1.msra.mxu0 0.0
    %383 = vmatprep.subr.mxu0 0.0
    %384 = vmatpush1.msra.mxu0 0.0
    %385 = vmatprep.subr.mxu0 0.0
    %386 = vmatpush1.msra.mxu0 0.0
    %387 = vmatprep.subr.mxu0 0.0
    %v388 = vand.u32 %v55, 4294901760
    %v389 = vsub.f32 %v55, %v388
    %v390 = vand.u32 %v389, 4294901760
    %391 = vmatpush1.msra.mxu0 %v390
    %392 = vmatprep.subr.mxu0 0.0
    %393 = vmatpush2.msra.mxu0 0.0
    %394 = vmatprep.subr.mxu0 0.0
    %395 = vmatpush2.msra.mxu0 0.0
    %396 = vmatprep.subr.mxu0 0.0
    %397 = vmatpush2.msra.mxu0 0.0
    %398 = vmatprep.subr.mxu0 0.0
    %399 = vmatpush2.msra.mxu0 0.0
    %400 = vmatprep.subr.mxu0 0.0
    %401 = vmatpush2.msra.mxu0 0.0
    %402 = vmatprep.subr.mxu0 0.0
    %403 = vmatpush2.msra.mxu0 0.0
    %404 = vmatprep.subr.mxu0 0.0
    %405 = vmatpush2.msra.mxu0 0.0
    %406 = vmatprep.subr.mxu0 0.0
    %407 = vmatpush2.msra.mxu0 0.0
    %408 = vmatprep.subr.mxu0 0.0
    %409 = vmatpush2.msra.mxu0 0.0
    %410 = vmatprep.subr.mxu0 0.0
    %411 = vmatpush2.msra.mxu0 0.0
    %412 = vmatprep.subr.mxu0 0.0
    %413 = vmatpush2.msra.mxu0 0.0
    %414 = vmatprep.subr.mxu0 0.0
    %415 = vmatpush2.msra.mxu0 0.0
    %416 = vmatprep.subr.mxu0 0.0
    %417 = vmatpush2.msra.mxu0 0.0
    %418 = vmatprep.subr.mxu0 0.0
    %419 = vmatpush2.msra.mxu0 0.0
    %420 = vmatprep.subr.mxu0 0.0
    %421 = vmatpush2.msra.mxu0 0.0
    %422 = vmatprep.subr.mxu0 0.0
    %423 = vmatpush2.msra.mxu0 0.0
    %424 = vmatprep.mubr.f32.mxu0 0.0
    %v425 = vand.u32 %v51, 4294901760
    %426 = vmatmul.mubr.f32.gmra.mxu0 %v425
    %v427 = vpop.f32.mrf.mxu0
    %v428 = vadd.f32 %v354, %v427
    %v429 = vpop.f32.mrf.mxu0
    %430 = vdwg.mxu0
    %431 = vmatprep.subr.mxu0 0.0
    %432 = vmatpush1.msra.mxu0 0.0
    %433 = vmatprep.subr.mxu0 0.0
    %434 = vmatpush1.msra.mxu0 0.0
    %435 = vmatprep.subr.mxu0 0.0
    %436 = vmatpush1.msra.mxu0 0.0
    %437 = vmatprep.subr.mxu0 0.0
    %438 = vmatpush1.msra.mxu0 0.0
    %439 = vmatprep.subr.mxu0 0.0
    %440 = vmatpush1.msra.mxu0 0.0
    %441 = vmatprep.subr.mxu0 0.0
    %442 = vmatpush1.msra.mxu0 0.0
    %443 = vmatprep.subr.mxu0 0.0
    %444 = vmatpush1.msra.mxu0 0.0
    %445 = vmatprep.subr.mxu0 0.0
    %446 = vmatpush1.msra.mxu0 0.0
    %447 = vmatprep.subr.mxu0 0.0
    %448 = vmatpush1.msra.mxu0 0.0
    %449 = vmatprep.subr.mxu0 0.0
    %450 = vmatpush1.msra.mxu0 0.0
    %451 = vmatprep.subr.mxu0 0.0
    %452 = vmatpush1.msra.mxu0 0.0
    %453 = vmatprep.subr.mxu0 0.0
    %454 = vmatpush1.msra.mxu0 0.0
    %455 = vmatprep.subr.mxu0 0.0
    %456 = vmatpush1.msra.mxu0 0.0
    %457 = vmatprep.subr.mxu0 0.0
    %458 = vmatpush1.msra.mxu0 0.0
    %459 = vmatprep.subr.mxu0 0.0
    %460 = vmatpush1.msra.mxu0 0.0
    %461 = vmatprep.subr.mxu0 0.0
    %v462 = vand.u32 %v55, 4294901760
    %463 = vmatpush1.msra.mxu0 %v462
    %464 = vmatprep.subr.mxu0 0.0
    %465 = vmatpush2.msra.mxu0 0.0
    %466 = vmatprep.subr.mxu0 0.0
    %467 = vmatpush2.msra.mxu0 0.0
    %468 = vmatprep.subr.mxu0 0.0
    %469 = vmatpush2.msra.mxu0 0.0
    %470 = vmatprep.subr.mxu0 0.0
    %471 = vmatpush2.msra.mxu0 0.0
    %472 = vmatprep.subr.mxu0 0.0
    %473 = vmatpush2.msra.mxu0 0.0
    %474 = vmatprep.subr.mxu0 0.0
    %475 = vmatpush2.msra.mxu0 0.0
    %476 = vmatprep.subr.mxu0 0.0
    %477 = vmatpush2.msra.mxu0 0.0
    %478 = vmatprep.subr.mxu0 0.0
    %479 = vmatpush2.msra.mxu0 0.0
    %480 = vmatprep.subr.mxu0 0.0
    %481 = vmatpush2.msra.mxu0 0.0
    %482 = vmatprep.subr.mxu0 0.0
    %483 = vmatpush2.msra.mxu0 0.0
    %484 = vmatprep.subr.mxu0 0.0
    %485 = vmatpush2.msra.mxu0 0.0
    %486 = vmatprep.subr.mxu0 0.0
    %487 = vmatpush2.msra.mxu0 0.0
    %488 = vmatprep.subr.mxu0 0.0
    %489 = vmatpush2.msra.mxu0 0.0
    %490 = vmatprep.subr.mxu0 0.0
    %491 = vmatpush2.msra.mxu0 0.0
    %492 = vmatprep.subr.mxu0 0.0
    %493 = vmatpush2.msra.mxu0 0.0
    %494 = vmatprep.subr.mxu0 0.0
    %495 = vmatpush2.msra.mxu0 0.0
    %496 = vmatprep.mubr.f32.mxu0 0.0
    %v497 = vand.u32 %v51, 4294901760
    %498 = vmatmul.mubr.f32.gmra.mxu0 %v497
    %v499 = vpop.f32.mrf.mxu0
    %v500 = vadd.f32 %v428, %v499
    %v501 = vpop.f32.mrf.mxu0
    %502 = vdwg.mxu0
    %v503 = vmax.f32 %v500, 0.0
    %v504 = vld [vmem:[#allocation2] sm:$0xff]
    %v505 = vld [vmem:[#allocation2 + $0x8] sm:$0xff]
    %v506 = vld [vmem:[#allocation2 + $0x10] sm:$0xff]
    %v507 = vld [vmem:[#allocation2 + $0x18] sm:$0xff]
    %v508 = vld [vmem:[#allocation2 + $0x20] sm:$0xff]
    %v509 = vld [vmem:[#allocation2 + $0x28] sm:$0xff]
    %v510 = vld [vmem:[#allocation2 + $0x30] sm:$0xff]
    %v511 = vld [vmem:[#allocation2 + $0x38] sm:$0xff]
    %v512 = vld [vmem:[#allocation2 + $0x40] sm:$0xff]
    %v513 = vld [vmem:[#allocation2 + $0x48] sm:$0xff]
    %v514 = vld [vmem:[#allocation2 + $0x50] sm:$0xff]
    %v515 = vld [vmem:[#allocation2 + $0x58] sm:$0xff]
    %v516 = vld [vmem:[#allocation2 + $0x60] sm:$0xff]
    %v517 = vld [vmem:[#allocation2 + $0x68] sm:$0xff]
    %v518 = vld [vmem:[#allocation2 + $0x70] sm:$0xff]
    %v519 = vld [vmem:[#allocation2 + $0x78] sm:$0xff]
    %v520 = vld [vmem:[%s4] sm:$0x1]
    %v522 = vlaneseq
    %v523 = vshrl.u32 %v522, 7
    %v524 = vsub.s32 0, %v523
    %v525 = vrot.slane %v520, %v524
    %527 = vmatprep.subr.mxu0 0.0
    %v528 = vand.u32 %v519, 4294901760
    %529 = vmatpush1.msra.mxu0 %v528
    %530 = vmatprep.subr.mxu0 0.0
    %v531 = vand.u32 %v518, 4294901760
    %532 = vmatpush1.msra.mxu0 %v531
    %533 = vmatprep.subr.mxu0 0.0
    %v534 = vand.u32 %v517, 4294901760
    %535 = vmatpush1.msra.mxu0 %v534
    %536 = vmatprep.subr.mxu0 0.0
    %v537 = vand.u32 %v516, 4294901760
    %538 = vmatpush1.msra.mxu0 %v537
    %539 = vmatprep.subr.mxu0 0.0
    %v540 = vand.u32 %v515, 4294901760
    %541 = vmatpush1.msra.mxu0 %v540
    %542 = vmatprep.subr.mxu0 0.0
    %v543 = vand.u32 %v514, 4294901760
    %544 = vmatpush1.msra.mxu0 %v543
    %545 = vmatprep.subr.mxu0 0.0
    %v546 = vand.u32 %v513, 4294901760
    %547 = vmatpush1.msra.mxu0 %v546
    %548 = vmatprep.subr.mxu0 0.0
    %v549 = vand.u32 %v512, 4294901760
    %550 = vmatpush1.msra.mxu0 %v549
    %551 = vmatprep.subr.mxu0 0.0
    %v552 = vand.u32 %v511, 4294901760
    %553 = vmatpush1.msra.mxu0 %v552
    %554 = vmatprep.subr.mxu0 0.0
    %v555 = vand.u32 %v510, 4294901760
    %556 = vmatpush1.msra.mxu0 %v555
    %557 = vmatprep.subr.mxu0 0.0
    %v558 = vand.u32 %v509, 4294901760
    %559 = vmatpush1.msra.mxu0 %v558
    %560 = vmatprep.subr.mxu0 0.0
    %v561 = vand.u32 %v508, 4294901760
    %562 = vmatpush1.msra.mxu0 %v561
    %563 = vmatprep.subr.mxu0 0.0
    %v564 = vand.u32 %v507, 4294901760
    %565 = vmatpush1.msra.mxu0 %v564
    %566 = vmatprep.subr.mxu0 0.0
    %v567 = vand.u32 %v506, 4294901760
    %568 = vmatpush1.msra.mxu0 %v567
    %569 = vmatprep.subr.mxu0 0.0
    %v570 = vand.u32 %v505, 4294901760
    %571 = vmatpush1.msra.mxu0 %v570
    %572 = vmatprep.subr.mxu0 0.0
    %v573 = vand.u32 %v504, 4294901760
    %574 = vmatpush1.msra.mxu0 %v573
    %575 = vmatprep.subr.mxu0 0.0
    %576 = vmatpush2.msra.mxu0 0.0
    %577 = vmatprep.subr.mxu0 0.0
    %578 = vmatpush2.msra.mxu0 0.0
    %579 = vmatprep.subr.mxu0 0.0
    %580 = vmatpush2.msra.mxu0 0.0
    %581 = vmatprep.subr.mxu0 0.0
    %582 = vmatpush2.msra.mxu0 0.0
    %583 = vmatprep.subr.mxu0 0.0
    %584 = vmatpush2.msra.mxu0 0.0
    %585 = vmatprep.subr.mxu0 0.0
    %586 = vmatpush2.msra.mxu0 0.0
    %587 = vmatprep.subr.mxu0 0.0
    %588 = vmatpush2.msra.mxu0 0.0
    %589 = vmatprep.subr.mxu0 0.0
    %590 = vmatpush2.msra.mxu0 0.0
    %591 = vmatprep.subr.mxu0 0.0
    %592 = vmatpush2.msra.mxu0 0.0
    %593 = vmatprep.subr.mxu0 0.0
    %594 = vmatpush2.msra.mxu0 0.0
    %595 = vmatprep.subr.mxu0 0.0
    %596 = vmatpush2.msra.mxu0 0.0
    %597 = vmatprep.subr.mxu0 0.0
    %598 = vmatpush2.msra.mxu0 0.0
    %599 = vmatprep.subr.mxu0 0.0
    %600 = vmatpush2.msra.mxu0 0.0
    %601 = vmatprep.subr.mxu0 0.0
    %602 = vmatpush2.msra.mxu0 0.0
    %603 = vmatprep.subr.mxu0 0.0
    %604 = vmatpush2.msra.mxu0 0.0
    %605 = vmatprep.subr.mxu0 0.0
    %606 = vmatpush2.msra.mxu0 0.0
    %607 = vmatprep.mubr.f32.mxu0 0.0
    %v608 = vand.u32 %v503, 4294901760
    %v609 = vsub.f32 %v503, %v608
    %v610 = vand.u32 %v609, 4294901760
    %v611 = vsub.f32 %v609, %v610
    %v612 = vand.u32 %v611, 4294901760
    %613 = vmatmul.mubr.f32.gmra.mxu0 %v612
    %v614 = vpop.f32.mrf.mxu0
    %v615 = vadd.f32 %v525, %v614
    %v616 = vpop.f32.mrf.mxu0
    %617 = vdwg.mxu0
    %618 = vmatprep.subr.mxu0 0.0
    %v619 = vand.u32 %v519, 4294901760
    %v620 = vsub.f32 %v519, %v619
    %v621 = vand.u32 %v620, 4294901760
    %v622 = vsub.f32 %v620, %v621
    %v623 = vand.u32 %v622, 4294901760
    %624 = vmatpush1.msra.mxu0 %v623
    %625 = vmatprep.subr.mxu0 0.0
    %v626 = vand.u32 %v518, 4294901760
    %v627 = vsub.f32 %v518, %v626
    %v628 = vand.u32 %v627, 4294901760
    %v629 = vsub.f32 %v627, %v628
    %v630 = vand.u32 %v629, 4294901760
    %631 = vmatpush1.msra.mxu0 %v630
    %632 = vmatprep.subr.mxu0 0.0
    %v633 = vand.u32 %v517, 4294901760
    %v634 = vsub.f32 %v517, %v633
    %v635 = vand.u32 %v634, 4294901760
    %v636 = vsub.f32 %v634, %v635
    %v637 = vand.u32 %v636, 4294901760
    %638 = vmatpush1.msra.mxu0 %v637
    %639 = vmatprep.subr.mxu0 0.0
    %v640 = vand.u32 %v516, 4294901760
    %v641 = vsub.f32 %v516, %v640
    %v642 = vand.u32 %v641, 4294901760
    %v643 = vsub.f32 %v641, %v642
    %v644 = vand.u32 %v643, 4294901760
    %645 = vmatpush1.msra.mxu0 %v644
    %646 = vmatprep.subr.mxu0 0.0
    %v647 = vand.u32 %v515, 4294901760
    %v648 = vsub.f32 %v515, %v647
    %v649 = vand.u32 %v648, 4294901760
    %v650 = vsub.f32 %v648, %v649
    %v651 = vand.u32 %v650, 4294901760
    %652 = vmatpush1.msra.mxu0 %v651
    %653 = vmatprep.subr.mxu0 0.0
    %v654 = vand.u32 %v514, 4294901760
    %v655 = vsub.f32 %v514, %v654
    %v656 = vand.u32 %v655, 4294901760
    %v657 = vsub.f32 %v655, %v656
    %v658 = vand.u32 %v657, 4294901760
    %659 = vmatpush1.msra.mxu0 %v658
    %660 = vmatprep.subr.mxu0 0.0
    %v661 = vand.u32 %v513, 4294901760
    %v662 = vsub.f32 %v513, %v661
    %v663 = vand.u32 %v662, 4294901760
    %v664 = vsub.f32 %v662, %v663
    %v665 = vand.u32 %v664, 4294901760
    %666 = vmatpush1.msra.mxu0 %v665
    %667 = vmatprep.subr.mxu0 0.0
    %v668 = vand.u32 %v512, 4294901760
    %v669 = vsub.f32 %v512, %v668
    %v670 = vand.u32 %v669, 4294901760
    %v671 = vsub.f32 %v669, %v670
    %v672 = vand.u32 %v671, 4294901760
    %673 = vmatpush1.msra.mxu0 %v672
    %674 = vmatprep.subr.mxu0 0.0
    %v675 = vand.u32 %v511, 4294901760
    %v676 = vsub.f32 %v511, %v675
    %v677 = vand.u32 %v676, 4294901760
    %v678 = vsub.f32 %v676, %v677
    %v679 = vand.u32 %v678, 4294901760
    %680 = vmatpush1.msra.mxu0 %v679
    %681 = vmatprep.subr.mxu0 0.0
    %v682 = vand.u32 %v510, 4294901760
    %v683 = vsub.f32 %v510, %v682
    %v684 = vand.u32 %v683, 4294901760
    %v685 = vsub.f32 %v683, %v684
    %v686 = vand.u32 %v685, 4294901760
    %687 = vmatpush1.msra.mxu0 %v686
    %688 = vmatprep.subr.mxu0 0.0
    %v689 = vand.u32 %v509, 4294901760
    %v690 = vsub.f32 %v509, %v689
    %v691 = vand.u32 %v690, 4294901760
    %v692 = vsub.f32 %v690, %v691
    %v693 = vand.u32 %v692, 4294901760
    %694 = vmatpush1.msra.mxu0 %v693
    %695 = vmatprep.subr.mxu0 0.0
    %v696 = vand.u32 %v508, 4294901760
    %v697 = vsub.f32 %v508, %v696
    %v698 = vand.u32 %v697, 4294901760
    %v699 = vsub.f32 %v697, %v698
    %v700 = vand.u32 %v699, 4294901760
    %701 = vmatpush1.msra.mxu0 %v700
    %702 = vmatprep.subr.mxu0 0.0
    %v703 = vand.u32 %v507, 4294901760
    %v704 = vsub.f32 %v507, %v703
    %v705 = vand.u32 %v704, 4294901760
    %v706 = vsub.f32 %v704, %v705
    %v707 = vand.u32 %v706, 4294901760
    %708 = vmatpush1.msra.mxu0 %v707
    %709 = vmatprep.subr.mxu0 0.0
    %v710 = vand.u32 %v506, 4294901760
    %v711 = vsub.f32 %v506, %v710
    %v712 = vand.u32 %v711, 4294901760
    %v713 = vsub.f32 %v711, %v712
    %v714 = vand.u32 %v713, 4294901760
    %715 = vmatpush1.msra.mxu0 %v714
    %716 = vmatprep.subr.mxu0 0.0
    %v717 = vand.u32 %v505, 4294901760
    %v718 = vsub.f32 %v505, %v717
    %v719 = vand.u32 %v718, 4294901760
    %v720 = vsub.f32 %v718, %v719
    %v721 = vand.u32 %v720, 4294901760
    %722 = vmatpush1.msra.mxu0 %v721
    %723 = vmatprep.subr.mxu0 0.0
    %v724 = vand.u32 %v504, 4294901760
    %v725 = vsub.f32 %v504, %v724
    %v726 = vand.u32 %v725, 4294901760
    %v727 = vsub.f32 %v725, %v726
    %v728 = vand.u32 %v727, 4294901760
    %729 = vmatpush1.msra.mxu0 %v728
    %730 = vmatprep.subr.mxu0 0.0
    %731 = vmatpush2.msra.mxu0 0.0
    %732 = vmatprep.subr.mxu0 0.0
    %733 = vmatpush2.msra.mxu0 0.0
    %734 = vmatprep.subr.mxu0 0.0
    %735 = vmatpush2.msra.mxu0 0.0
    %736 = vmatprep.subr.mxu0 0.0
    %737 = vmatpush2.msra.mxu0 0.0
    %738 = vmatprep.subr.mxu0 0.0
    %739 = vmatpush2.msra.mxu0 0.0
    %740 = vmatprep.subr.mxu0 0.0
    %741 = vmatpush2.msra.mxu0 0.0
    %742 = vmatprep.subr.mxu0 0.0
    %743 = vmatpush2.msra.mxu0 0.0
    %744 = vmatprep.subr.mxu0 0.0
    %745 = vmatpush2.msra.mxu0 0.0
    %746 = vmatprep.subr.mxu0 0.0
    %747 = vmatpush2.msra.mxu0 0.0
    %748 = vmatprep.subr.mxu0 0.0
    %749 = vmatpush2.msra.mxu0 0.0
    %750 = vmatprep.subr.mxu0 0.0
    %751 = vmatpush2.msra.mxu0 0.0
    %752 = vmatprep.subr.mxu0 0.0
    %753 = vmatpush2.msra.mxu0 0.0
    %754 = vmatprep.subr.mxu0 0.0
    %755 = vmatpush2.msra.mxu0 0.0
    %756 = vmatprep.subr.mxu0 0.0
    %757 = vmatpush2.msra.mxu0 0.0
    %758 = vmatprep.subr.mxu0 0.0
    %759 = vmatpush2.msra.mxu0 0.0
    %760 = vmatprep.subr.mxu0 0.0
    %761 = vmatpush2.msra.mxu0 0.0
    %762 = vmatprep.mubr.f32.mxu0 0.0
    %v763 = vand.u32 %v503, 4294901760
    %764 = vmatmul.mubr.f32.gmra.mxu0 %v763
    %v765 = vpop.f32.mrf.mxu0
    %v766 = vadd.f32 %v615, %v765
    %v767 = vpop.f32.mrf.mxu0
    %768 = vdwg.mxu0
    %769 = vmatprep.subr.mxu0 0.0
    %v770 = vand.u32 %v519, 4294901760
    %v771 = vsub.f32 %v519, %v770
    %772 = vmatpush1.msra.mxu0 %v771
    %773 = vmatprep.subr.mxu0 0.0
    %v774 = vand.u32 %v518, 4294901760
    %v775 = vsub.f32 %v518, %v774
    %776 = vmatpush1.msra.mxu0 %v775
    %777 = vmatprep.subr.mxu0 0.0
    %v778 = vand.u32 %v517, 4294901760
    %v779 = vsub.f32 %v517, %v778
    %780 = vmatpush1.msra.mxu0 %v779
    %781 = vmatprep.subr.mxu0 0.0
    %v782 = vand.u32 %v516, 4294901760
    %v783 = vsub.f32 %v516, %v782
    %784 = vmatpush1.msra.mxu0 %v783
    %785 = vmatprep.subr.mxu0 0.0
    %v786 = vand.u32 %v515, 4294901760
    %v787 = vsub.f32 %v515, %v786
    %788 = vmatpush1.msra.mxu0 %v787
    %789 = vmatprep.subr.mxu0 0.0
    %v790 = vand.u32 %v514, 4294901760
    %v791 = vsub.f32 %v514, %v790
    %792 = vmatpush1.msra.mxu0 %v791
    %793 = vmatprep.subr.mxu0 0.0
    %v794 = vand.u32 %v513, 4294901760
    %v795 = vsub.f32 %v513, %v794
    %796 = vmatpush1.msra.mxu0 %v795
    %797 = vmatprep.subr.mxu0 0.0
    %v798 = vand.u32 %v512, 4294901760
    %v799 = vsub.f32 %v512, %v798
    %800 = vmatpush1.msra.mxu0 %v799
    %801 = vmatprep.subr.mxu0 0.0
    %v802 = vand.u32 %v511, 4294901760
    %v803 = vsub.f32 %v511, %v802
    %804 = vmatpush1.msra.mxu0 %v803
    %805 = vmatprep.subr.mxu0 0.0
    %v806 = vand.u32 %v510, 4294901760
    %v807 = vsub.f32 %v510, %v806
    %808 = vmatpush1.msra.mxu0 %v807
    %809 = vmatprep.subr.mxu0 0.0
    %v810 = vand.u32 %v509, 4294901760
    %v811 = vsub.f32 %v509, %v810
    %812 = vmatpush1.msra.mxu0 %v811
    %813 = vmatprep.subr.mxu0 0.0
    %v814 = vand.u32 %v508, 4294901760
    %v815 = vsub.f32 %v508, %v814
    %816 = vmatpush1.msra.mxu0 %v815
    %817 = vmatprep.subr.mxu0 0.0
    %v818 = vand.u32 %v507, 4294901760
    %v819 = vsub.f32 %v507, %v818
    %820 = vmatpush1.msra.mxu0 %v819
    %821 = vmatprep.subr.mxu0 0.0
    %v822 = vand.u32 %v506, 4294901760
    %v823 = vsub.f32 %v506, %v822
    %824 = vmatpush1.msra.mxu0 %v823
    %825 = vmatprep.subr.mxu0 0.0
    %v826 = vand.u32 %v505, 4294901760
    %v827 = vsub.f32 %v505, %v826
    %828 = vmatpush1.msra.mxu0 %v827
    %829 = vmatprep.subr.mxu0 0.0
    %v830 = vand.u32 %v504, 4294901760
    %v831 = vsub.f32 %v504, %v830
    %832 = vmatpush1.msra.mxu0 %v831
    %833 = vmatprep.subr.mxu0 0.0
    %834 = vmatpush2.msra.mxu0 0.0
    %835 = vmatprep.subr.mxu0 0.0
    %836 = vmatpush2.msra.mxu0 0.0
    %837 = vmatprep.subr.mxu0 0.0
    %838 = vmatpush2.msra.mxu0 0.0
    %839 = vmatprep.subr.mxu0 0.0
    %840 = vmatpush2.msra.mxu0 0.0
    %841 = vmatprep.subr.mxu0 0.0
    %842 = vmatpush2.msra.mxu0 0.0
    %843 = vmatprep.subr.mxu0 0.0
    %844 = vmatpush2.msra.mxu0 0.0
    %845 = vmatprep.subr.mxu0 0.0
    %846 = vmatpush2.msra.mxu0 0.0
    %847 = vmatprep.subr.mxu0 0.0
    %848 = vmatpush2.msra.mxu0 0.0
    %849 = vmatprep.subr.mxu0 0.0
    %850 = vmatpush2.msra.mxu0 0.0
    %851 = vmatprep.subr.mxu0 0.0
    %852 = vmatpush2.msra.mxu0 0.0
    %853 = vmatprep.subr.mxu0 0.0
    %854 = vmatpush2.msra.mxu0 0.0
    %855 = vmatprep.subr.mxu0 0.0
    %856 = vmatpush2.msra.mxu0 0.0
    %857 = vmatprep.subr.mxu0 0.0
    %858 = vmatpush2.msra.mxu0 0.0
    %859 = vmatprep.subr.mxu0 0.0
    %860 = vmatpush2.msra.mxu0 0.0
    %861 = vmatprep.subr.mxu0 0.0
    %862 = vmatpush2.msra.mxu0 0.0
    %863 = vmatprep.subr.mxu0 0.0
    %864 = vmatpush2.msra.mxu0 0.0
    %865 = vmatprep.mubr.f32.mxu0 0.0
    %v866 = vand.u32 %v503, 4294901760
    %v867 = vsub.f32 %v503, %v866
    %868 = vmatmul.mubr.f32.gmra.mxu0 %v867
    %v869 = vpop.f32.mrf.mxu0
    %v870 = vadd.f32 %v766, %v869
    %v871 = vpop.f32.mrf.mxu0
    %872 = vdwg.mxu0
    %873 = vmatprep.subr.mxu0 0.0
    %v874 = vand.u32 %v519, 4294901760
    %875 = vmatpush1.msra.mxu0 %v874
    %876 = vmatprep.subr.mxu0 0.0
    %v877 = vand.u32 %v518, 4294901760
    %878 = vmatpush1.msra.mxu0 %v877
    %879 = vmatprep.subr.mxu0 0.0
    %v880 = vand.u32 %v517, 4294901760
    %881 = vmatpush1.msra.mxu0 %v880
    %882 = vmatprep.subr.mxu0 0.0
    %v883 = vand.u32 %v516, 4294901760
    %884 = vmatpush1.msra.mxu0 %v883
    %885 = vmatprep.subr.mxu0 0.0
    %v886 = vand.u32 %v515, 4294901760
    %887 = vmatpush1.msra.mxu0 %v886
    %888 = vmatprep.subr.mxu0 0.0
    %v889 = vand.u32 %v514, 4294901760
    %890 = vmatpush1.msra.mxu0 %v889
    %891 = vmatprep.subr.mxu0 0.0
    %v892 = vand.u32 %v513, 4294901760
    %893 = vmatpush1.msra.mxu0 %v892
    %894 = vmatprep.subr.mxu0 0.0
    %v895 = vand.u32 %v512, 4294901760
    %896 = vmatpush1.msra.mxu0 %v895
    %897 = vmatprep.subr.mxu0 0.0
    %v898 = vand.u32 %v511, 4294901760
    %899 = vmatpush1.msra.mxu0 %v898
    %900 = vmatprep.subr.mxu0 0.0
    %v901 = vand.u32 %v510, 4294901760
    %902 = vmatpush1.msra.mxu0 %v901
    %903 = vmatprep.subr.mxu0 0.0
    %v904 = vand.u32 %v509, 4294901760
    %905 = vmatpush1.msra.mxu0 %v904
    %906 = vmatprep.subr.mxu0 0.0
    %v907 = vand.u32 %v508, 4294901760
    %908 = vmatpush1.msra.mxu0 %v907
    %909 = vmatprep.subr.mxu0 0.0
    %v910 = vand.u32 %v507, 4294901760
    %911 = vmatpush1.msra.mxu0 %v910
    %912 = vmatprep.subr.mxu0 0.0
    %v913 = vand.u32 %v506, 4294901760
    %914 = vmatpush1.msra.mxu0 %v913
    %915 = vmatprep.subr.mxu0 0.0
    %v916 = vand.u32 %v505, 4294901760
    %917 = vmatpush1.msra.mxu0 %v916
    %918 = vmatprep.subr.mxu0 0.0
    %v919 = vand.u32 %v504, 4294901760
    %920 = vmatpush1.msra.mxu0 %v919
    %921 = vmatprep.subr.mxu0 0.0
    %922 = vmatpush2.msra.mxu0 0.0
    %923 = vmatprep.subr.mxu0 0.0
    %924 = vmatpush2.msra.mxu0 0.0
    %925 = vmatprep.subr.mxu0 0.0
    %926 = vmatpush2.msra.mxu0 0.0
    %927 = vmatprep.subr.mxu0 0.0
    %928 = vmatpush2.msra.mxu0 0.0
    %929 = vmatprep.subr.mxu0 0.0
    %930 = vmatpush2.msra.mxu0 0.0
    %931 = vmatprep.subr.mxu0 0.0
    %932 = vmatpush2.msra.mxu0 0.0
    %933 = vmatprep.subr.mxu0 0.0
    %934 = vmatpush2.msra.mxu0 0.0
    %935 = vmatprep.subr.mxu0 0.0
    %936 = vmatpush2.msra.mxu0 0.0
    %937 = vmatprep.subr.mxu0 0.0
    %938 = vmatpush2.msra.mxu0 0.0
    %939 = vmatprep.subr.mxu0 0.0
    %940 = vmatpush2.msra.mxu0 0.0
    %941 = vmatprep.subr.mxu0 0.0
    %942 = vmatpush2.msra.mxu0 0.0
    %943 = vmatprep.subr.mxu0 0.0
    %944 = vmatpush2.msra.mxu0 0.0
    %945 = vmatprep.subr.mxu0 0.0
    %946 = vmatpush2.msra.mxu0 0.0
    %947 = vmatprep.subr.mxu0 0.0
    %948 = vmatpush2.msra.mxu0 0.0
    %949 = vmatprep.subr.mxu0 0.0
    %950 = vmatpush2.msra.mxu0 0.0
    %951 = vmatprep.subr.mxu0 0.0
    %952 = vmatpush2.msra.mxu0 0.0
    %953 = vmatprep.mubr.f32.mxu0 0.0
    %v954 = vand.u32 %v503, 4294901760
    %v955 = vsub.f32 %v503, %v954
    %v956 = vand.u32 %v955, 4294901760
    %957 = vmatmul.mubr.f32.gmra.mxu0 %v956
    %v958 = vpop.f32.mrf.mxu0
    %v959 = vadd.f32 %v870, %v958
    %v960 = vpop.f32.mrf.mxu0
    %961 = vdwg.mxu0
    %962 = vmatprep.subr.mxu0 0.0
    %v963 = vand.u32 %v519, 4294901760
    %v964 = vsub.f32 %v519, %v963
    %v965 = vand.u32 %v964, 4294901760
    %966 = vmatpush1.msra.mxu0 %v965
    %967 = vmatprep.subr.mxu0 0.0
    %v968 = vand.u32 %v518, 4294901760
    %v969 = vsub.f32 %v518, %v968
    %v970 = vand.u32 %v969, 4294901760
    %971 = vmatpush1.msra.mxu0 %v970
    %972 = vmatprep.subr.mxu0 0.0
    %v973 = vand.u32 %v517, 4294901760
    %v974 = vsub.f32 %v517, %v973
    %v975 = vand.u32 %v974, 4294901760
    %976 = vmatpush1.msra.mxu0 %v975
    %977 = vmatprep.subr.mxu0 0.0
    %v978 = vand.u32 %v516, 4294901760
    %v979 = vsub.f32 %v516, %v978
    %v980 = vand.u32 %v979, 4294901760
    %981 = vmatpush1.msra.mxu0 %v980
    %982 = vmatprep.subr.mxu0 0.0
    %v983 = vand.u32 %v515, 4294901760
    %v984 = vsub.f32 %v515, %v983
    %v985 = vand.u32 %v984, 4294901760
    %986 = vmatpush1.msra.mxu0 %v985
    %987 = vmatprep.subr.mxu0 0.0
    %v988 = vand.u32 %v514, 4294901760
    %v989 = vsub.f32 %v514, %v988
    %v990 = vand.u32 %v989, 4294901760
    %991 = vmatpush1.msra.mxu0 %v990
    %992 = vmatprep.subr.mxu0 0.0
    %v993 = vand.u32 %v513, 4294901760
    %v994 = vsub.f32 %v513, %v993
    %v995 = vand.u32 %v994, 4294901760
    %996 = vmatpush1.msra.mxu0 %v995
    %997 = vmatprep.subr.mxu0 0.0
    %v998 = vand.u32 %v512, 4294901760
    %v999 = vsub.f32 %v512, %v998
    %v1000 = vand.u32 %v999, 4294901760
    %1001 = vmatpush1.msra.mxu0 %v1000
    %1002 = vmatprep.subr.mxu0 0.0
    %v1003 = vand.u32 %v511, 4294901760
    %v1004 = vsub.f32 %v511, %v1003
    %v1005 = vand.u32 %v1004, 4294901760
    %1006 = vmatpush1.msra.mxu0 %v1005
    %1007 = vmatprep.subr.mxu0 0.0
    %v1008 = vand.u32 %v510, 4294901760
    %v1009 = vsub.f32 %v510, %v1008
    %v1010 = vand.u32 %v1009, 4294901760
    %1011 = vmatpush1.msra.mxu0 %v1010
    %1012 = vmatprep.subr.mxu0 0.0
    %v1013 = vand.u32 %v509, 4294901760
    %v1014 = vsub.f32 %v509, %v1013
    %v1015 = vand.u32 %v1014, 4294901760
    %1016 = vmatpush1.msra.mxu0 %v1015
    %1017 = vmatprep.subr.mxu0 0.0
    %v1018 = vand.u32 %v508, 4294901760
    %v1019 = vsub.f32 %v508, %v1018
    %v1020 = vand.u32 %v1019, 4294901760
    %1021 = vmatpush1.msra.mxu0 %v1020
    %1022 = vmatprep.subr.mxu0 0.0
    %v1023 = vand.u32 %v507, 4294901760
    %v1024 = vsub.f32 %v507, %v1023
    %v1025 = vand.u32 %v1024, 4294901760
    %1026 = vmatpush1.msra.mxu0 %v1025
    %1027 = vmatprep.subr.mxu0 0.0
    %v1028 = vand.u32 %v506, 4294901760
    %v1029 = vsub.f32 %v506, %v1028
    %v1030 = vand.u32 %v1029, 4294901760
    %1031 = vmatpush1.msra.mxu0 %v1030
    %1032 = vmatprep.subr.mxu0 0.0
    %v1033 = vand.u32 %v505, 4294901760
    %v1034 = vsub.f32 %v505, %v1033
    %v1035 = vand.u32 %v1034, 4294901760
    %1036 = vmatpush1.msra.mxu0 %v1035
    %1037 = vmatprep.subr.mxu0 0.0
    %v1038 = vand.u32 %v504, 4294901760
    %v1039 = vsub.f32 %v504, %v1038
    %v1040 = vand.u32 %v1039, 4294901760
    %1041 = vmatpush1.msra.mxu0 %v1040
    %1042 = vmatprep.subr.mxu0 0.0
    %1043 = vmatpush2.msra.mxu0 0.0
    %1044 = vmatprep.subr.mxu0 0.0
    %1045 = vmatpush2.msra.mxu0 0.0
    %1046 = vmatprep.subr.mxu0 0.0
    %1047 = vmatpush2.msra.mxu0 0.0
    %1048 = vmatprep.subr.mxu0 0.0
    %1049 = vmatpush2.msra.mxu0 0.0
    %1050 = vmatprep.subr.mxu0 0.0
    %1051 = vmatpush2.msra.mxu0 0.0
    %1052 = vmatprep.subr.mxu0 0.0
    %1053 = vmatpush2.msra.mxu0 0.0
    %1054 = vmatprep.subr.mxu0 0.0
    %1055 = vmatpush2.msra.mxu0 0.0
    %1056 = vmatprep.subr.mxu0 0.0
    %1057 = vmatpush2.msra.mxu0 0.0
    %1058 = vmatprep.subr.mxu0 0.0
    %1059 = vmatpush2.msra.mxu0 0.0
    %1060 = vmatprep.subr.mxu0 0.0
    %1061 = vmatpush2.msra.mxu0 0.0
    %1062 = vmatprep.subr.mxu0 0.0
    %1063 = vmatpush2.msra.mxu0 0.0
    %1064 = vmatprep.subr.mxu0 0.0
    %1065 = vmatpush2.msra.mxu0 0.0
    %1066 = vmatprep.subr.mxu0 0.0
    %1067 = vmatpush2.msra.mxu0 0.0
    %1068 = vmatprep.subr.mxu0 0.0
    %1069 = vmatpush2.msra.mxu0 0.0
    %1070 = vmatprep.subr.mxu0 0.0
    %1071 = vmatpush2.msra.mxu0 0.0
    %1072 = vmatprep.subr.mxu0 0.0
    %1073 = vmatpush2.msra.mxu0 0.0
    %1074 = vmatprep.mubr.f32.mxu0 0.0
    %v1075 = vand.u32 %v503, 4294901760
    %1076 = vmatmul.mubr.f32.gmra.mxu0 %v1075
    %v1077 = vpop.f32.mrf.mxu0
    %v1078 = vadd.f32 %v959, %v1077
    %v1079 = vpop.f32.mrf.mxu0
    %1080 = vdwg.mxu0
    %1081 = vmatprep.subr.mxu0 0.0
    %v1082 = vand.u32 %v519, 4294901760
    %1083 = vmatpush1.msra.mxu0 %v1082
    %1084 = vmatprep.subr.mxu0 0.0
    %v1085 = vand.u32 %v518, 4294901760
    %1086 = vmatpush1.msra.mxu0 %v1085
    %1087 = vmatprep.subr.mxu0 0.0
    %v1088 = vand.u32 %v517, 4294901760
    %1089 = vmatpush1.msra.mxu0 %v1088
    %1090 = vmatprep.subr.mxu0 0.0
    %v1091 = vand.u32 %v516, 4294901760
    %1092 = vmatpush1.msra.mxu0 %v1091
    %1093 = vmatprep.subr.mxu0 0.0
    %v1094 = vand.u32 %v515, 4294901760
    %1095 = vmatpush1.msra.mxu0 %v1094
    %1096 = vmatprep.subr.mxu0 0.0
    %v1097 = vand.u32 %v514, 4294901760
    %1098 = vmatpush1.msra.mxu0 %v1097
    %1099 = vmatprep.subr.mxu0 0.0
    %v1100 = vand.u32 %v513, 4294901760
    %1101 = vmatpush1.msra.mxu0 %v1100
    %1102 = vmatprep.subr.mxu0 0.0
    %v1103 = vand.u32 %v512, 4294901760
    %1104 = vmatpush1.msra.mxu0 %v1103
    %1105 = vmatprep.subr.mxu0 0.0
    %v1106 = vand.u32 %v511, 4294901760
    %1107 = vmatpush1.msra.mxu0 %v1106
    %1108 = vmatprep.subr.mxu0 0.0
    %v1109 = vand.u32 %v510, 4294901760
    %1110 = vmatpush1.msra.mxu0 %v1109
    %1111 = vmatprep.subr.mxu0 0.0
    %v1112 = vand.u32 %v509, 4294901760
    %1113 = vmatpush1.msra.mxu0 %v1112
    %1114 = vmatprep.subr.mxu0 0.0
    %v1115 = vand.u32 %v508, 4294901760
    %1116 = vmatpush1.msra.mxu0 %v1115
    %1117 = vmatprep.subr.mxu0 0.0
    %v1118 = vand.u32 %v507, 4294901760
    %1119 = vmatpush1.msra.mxu0 %v1118
    %1120 = vmatprep.subr.mxu0 0.0
    %v1121 = vand.u32 %v506, 4294901760
    %1122 = vmatpush1.msra.mxu0 %v1121
    %1123 = vmatprep.subr.mxu0 0.0
    %v1124 = vand.u32 %v505, 4294901760
    %1125 = vmatpush1.msra.mxu0 %v1124
    %1126 = vmatprep.subr.mxu0 0.0
    %v1127 = vand.u32 %v504, 4294901760
    %1128 = vmatpush1.msra.mxu0 %v1127
    %1129 = vmatprep.subr.mxu0 0.0
    %1130 = vmatpush2.msra.mxu0 0.0
    %1131 = vmatprep.subr.mxu0 0.0
    %1132 = vmatpush2.msra.mxu0 0.0
    %1133 = vmatprep.subr.mxu0 0.0
    %1134 = vmatpush2.msra.mxu0 0.0
    %1135 = vmatprep.subr.mxu0 0.0
    %1136 = vmatpush2.msra.mxu0 0.0
    %1137 = vmatprep.subr.mxu0 0.0
    %1138 = vmatpush2.msra.mxu0 0.0
    %1139 = vmatprep.subr.mxu0 0.0
    %1140 = vmatpush2.msra.mxu0 0.0
    %1141 = vmatprep.subr.mxu0 0.0
    %1142 = vmatpush2.msra.mxu0 0.0
    %1143 = vmatprep.subr.mxu0 0.0
    %1144 = vmatpush2.msra.mxu0 0.0
    %1145 = vmatprep.subr.mxu0 0.0
    %1146 = vmatpush2.msra.mxu0 0.0
    %1147 = vmatprep.subr.mxu0 0.0
    %1148 = vmatpush2.msra.mxu0 0.0
    %1149 = vmatprep.subr.mxu0 0.0
    %1150 = vmatpush2.msra.mxu0 0.0
    %1151 = vmatprep.subr.mxu0 0.0
    %1152 = vmatpush2.msra.mxu0 0.0
    %1153 = vmatprep.subr.mxu0 0.0
    %1154 = vmatpush2.msra.mxu0 0.0
    %1155 = vmatprep.subr.mxu0 0.0
    %1156 = vmatpush2.msra.mxu0 0.0
    %1157 = vmatprep.subr.mxu0 0.0
    %1158 = vmatpush2.msra.mxu0 0.0
    %1159 = vmatprep.subr.mxu0 0.0
    %1160 = vmatpush2.msra.mxu0 0.0
    %1161 = vmatprep.mubr.f32.mxu0 0.0
    %v1162 = vand.u32 %v503, 4294901760
    %1163 = vmatmul.mubr.f32.gmra.mxu0 %v1162
    %v1164 = vpop.f32.mrf.mxu0
    %v1165 = vadd.f32 %v1078, %v1164
    %v1166 = vpop.f32.mrf.mxu0
    %1167 = vdwg.mxu0
    %v1168 = vmax.f32 %v1165, 0.0
    %v1169 = vld [vmem:[%s5] sm:$0xff]
    %v1170 = vld [vmem:[%s6] sm:$0xff]
    %1172 = vset.pattern.permute.xlu0 0
    %1173 = vperm.xlu0 %1172, %v1170
    %v1174 = vpop.permute.xlu0 %1173
    %1176 = vmatprep.subr.mxu0 0.0
    %1177 = vmatpush1.xpose.msra.mxu0 0.0
    %1178 = vmatprep.subr.mxu0 0.0
    %1179 = vmatpush1.xpose.msra.mxu0 0.0
    %1180 = vmatprep.subr.mxu0 0.0
    %1181 = vmatpush1.xpose.msra.mxu0 0.0
    %1182 = vmatprep.subr.mxu0 0.0
    %1183 = vmatpush1.xpose.msra.mxu0 0.0
    %1184 = vmatprep.subr.mxu0 0.0
    %1185 = vmatpush1.xpose.msra.mxu0 0.0
    %1186 = vmatprep.subr.mxu0 0.0
    %1187 = vmatpush1.xpose.msra.mxu0 0.0
    %1188 = vmatprep.subr.mxu0 0.0
    %1189 = vmatpush1.xpose.msra.mxu0 0.0
    %1190 = vmatprep.subr.mxu0 0.0
    %1191 = vmatpush1.xpose.msra.mxu0 0.0
    %1192 = vmatprep.subr.mxu0 0.0
    %1193 = vmatpush1.xpose.msra.mxu0 0.0
    %1194 = vmatprep.subr.mxu0 0.0
    %1195 = vmatpush1.xpose.msra.mxu0 0.0
    %1196 = vmatprep.subr.mxu0 0.0
    %1197 = vmatpush1.xpose.msra.mxu0 0.0
    %1198 = vmatprep.subr.mxu0 0.0
    %1199 = vmatpush1.xpose.msra.mxu0 0.0
    %1200 = vmatprep.subr.mxu0 0.0
    %1201 = vmatpush1.xpose.msra.mxu0 0.0
    %1202 = vmatprep.subr.mxu0 0.0
    %1203 = vmatpush1.xpose.msra.mxu0 0.0
    %1204 = vmatprep.subr.mxu0 0.0
    %1205 = vmatpush1.xpose.msra.mxu0 0.0
    %1206 = vmatprep.subr.mxu0 0.0
    %v1207 = vand.u32 %v1168, 4294901760
    %1208 = vmatpush1.xpose.msra.mxu0 %v1207
    %1209 = vmatprep.subr.mxu0 0.0
    %1210 = vmatpush2.xpose.msra.mxu0 0.0
    %1211 = vmatprep.subr.mxu0 0.0
    %1212 = vmatpush2.xpose.msra.mxu0 0.0
    %1213 = vmatprep.subr.mxu0 0.0
    %1214 = vmatpush2.xpose.msra.mxu0 0.0
    %1215 = vmatprep.subr.mxu0 0.0
    %1216 = vmatpush2.xpose.msra.mxu0 0.0
    %1217 = vmatprep.subr.mxu0 0.0
    %1218 = vmatpush2.xpose.msra.mxu0 0.0
    %1219 = vmatprep.subr.mxu0 0.0
    %1220 = vmatpush2.xpose.msra.mxu0 0.0
    %1221 = vmatprep.subr.mxu0 0.0
    %1222 = vmatpush2.xpose.msra.mxu0 0.0
    %1223 = vmatprep.subr.mxu0 0.0
    %1224 = vmatpush2.xpose.msra.mxu0 0.0
    %1225 = vmatprep.subr.mxu0 0.0
    %1226 = vmatpush2.xpose.msra.mxu0 0.0
    %1227 = vmatprep.subr.mxu0 0.0
    %1228 = vmatpush2.xpose.msra.mxu0 0.0
    %1229 = vmatprep.subr.mxu0 0.0
    %1230 = vmatpush2.xpose.msra.mxu0 0.0
    %1231 = vmatprep.subr.mxu0 0.0
    %1232 = vmatpush2.xpose.msra.mxu0 0.0
    %1233 = vmatprep.subr.mxu0 0.0
    %1234 = vmatpush2.xpose.msra.mxu0 0.0
    %1235 = vmatprep.subr.mxu0 0.0
    %1236 = vmatpush2.xpose.msra.mxu0 0.0
    %1237 = vmatprep.subr.mxu0 0.0
    %1238 = vmatpush2.xpose.msra.mxu0 0.0
    %1239 = vmatprep.subr.mxu0 0.0
    %1240 = vmatpush2.xpose.msra.mxu0 0.0
    %1241 = vmatprep.mubr.f32.mxu0 0.0
    %v1242 = vand.u32 %v1169, 4294901760
    %v1243 = vsub.f32 %v1169, %v1242
    %v1244 = vand.u32 %v1243, 4294901760
    %v1245 = vsub.f32 %v1243, %v1244
    %v1246 = vand.u32 %v1245, 4294901760
    %1247 = vmatmul.mubr.f32.gmra.mxu0 %v1246
    %v1248 = vpop.f32.mrf.mxu0
    %v1249 = vadd.f32 %v1174, %v1248
    %v1250 = vpop.f32.mrf.mxu0
    %1251 = vdwg.mxu0
    %1252 = vmatprep.subr.mxu0 0.0
    %1253 = vmatpush1.xpose.msra.mxu0 0.0
    %1254 = vmatprep.subr.mxu0 0.0
    %1255 = vmatpush1.xpose.msra.mxu0 0.0
    %1256 = vmatprep.subr.mxu0 0.0
    %1257 = vmatpush1.xpose.msra.mxu0 0.0
    %1258 = vmatprep.subr.mxu0 0.0
    %1259 = vmatpush1.xpose.msra.mxu0 0.0
    %1260 = vmatprep.subr.mxu0 0.0
    %1261 = vmatpush1.xpose.msra.mxu0 0.0
    %1262 = vmatprep.subr.mxu0 0.0
    %1263 = vmatpush1.xpose.msra.mxu0 0.0
    %1264 = vmatprep.subr.mxu0 0.0
    %1265 = vmatpush1.xpose.msra.mxu0 0.0
    %1266 = vmatprep.subr.mxu0 0.0
    %1267 = vmatpush1.xpose.msra.mxu0 0.0
    %1268 = vmatprep.subr.mxu0 0.0
    %1269 = vmatpush1.xpose.msra.mxu0 0.0
    %1270 = vmatprep.subr.mxu0 0.0
    %1271 = vmatpush1.xpose.msra.mxu0 0.0
    %1272 = vmatprep.subr.mxu0 0.0
    %1273 = vmatpush1.xpose.msra.mxu0 0.0
    %1274 = vmatprep.subr.mxu0 0.0
    %1275 = vmatpush1.xpose.msra.mxu0 0.0
    %1276 = vmatprep.subr.mxu0 0.0
    %1277 = vmatpush1.xpose.msra.mxu0 0.0
    %1278 = vmatprep.subr.mxu0 0.0
    %1279 = vmatpush1.xpose.msra.mxu0 0.0
    %1280 = vmatprep.subr.mxu0 0.0
    %1281 = vmatpush1.xpose.msra.mxu0 0.0
    %1282 = vmatprep.subr.mxu0 0.0
    %v1283 = vand.u32 %v1168, 4294901760
    %v1284 = vsub.f32 %v1168, %v1283
    %v1285 = vand.u32 %v1284, 4294901760
    %v1286 = vsub.f32 %v1284, %v1285
    %v1287 = vand.u32 %v1286, 4294901760
    %1288 = vmatpush1.xpose.msra.mxu0 %v1287
    %1289 = vmatprep.subr.mxu0 0.0
    %1290 = vmatpush2.xpose.msra.mxu0 0.0
    %1291 = vmatprep.subr.mxu0 0.0
    %1292 = vmatpush2.xpose.msra.mxu0 0.0
    %1293 = vmatprep.subr.mxu0 0.0
    %1294 = vmatpush2.xpose.msra.mxu0 0.0
    %1295 = vmatprep.subr.mxu0 0.0
    %1296 = vmatpush2.xpose.msra.mxu0 0.0
    %1297 = vmatprep.subr.mxu0 0.0
    %1298 = vmatpush2.xpose.msra.mxu0 0.0
    %1299 = vmatprep.subr.mxu0 0.0
    %1300 = vmatpush2.xpose.msra.mxu0 0.0
    %1301 = vmatprep.subr.mxu0 0.0
    %1302 = vmatpush2.xpose.msra.mxu0 0.0
    %1303 = vmatprep.subr.mxu0 0.0
    %1304 = vmatpush2.xpose.msra.mxu0 0.0
    %1305 = vmatprep.subr.mxu0 0.0
    %1306 = vmatpush2.xpose.msra.mxu0 0.0
    %1307 = vmatprep.subr.mxu0 0.0
    %1308 = vmatpush2.xpose.msra.mxu0 0.0
    %1309 = vmatprep.subr.mxu0 0.0
    %1310 = vmatpush2.xpose.msra.mxu0 0.0
    %1311 = vmatprep.subr.mxu0 0.0
    %1312 = vmatpush2.xpose.msra.mxu0 0.0
    %1313 = vmatprep.subr.mxu0 0.0
    %1314 = vmatpush2.xpose.msra.mxu0 0.0
    %1315 = vmatprep.subr.mxu0 0.0
    %1316 = vmatpush2.xpose.msra.mxu0 0.0
    %1317 = vmatprep.subr.mxu0 0.0
    %1318 = vmatpush2.xpose.msra.mxu0 0.0
    %1319 = vmatprep.subr.mxu0 0.0
    %1320 = vmatpush2.xpose.msra.mxu0 0.0
    %1321 = vmatprep.mubr.f32.mxu0 0.0
    %v1322 = vand.u32 %v1169, 4294901760
    %1323 = vmatmul.mubr.f32.gmra.mxu0 %v1322
    %v1324 = vpop.f32.mrf.mxu0
    %v1325 = vadd.f32 %v1249, %v1324
    %v1326 = vpop.f32.mrf.mxu0
    %1327 = vdwg.mxu0
    %1328 = vmatprep.subr.mxu0 0.0
    %1329 = vmatpush1.xpose.msra.mxu0 0.0
    %1330 = vmatprep.subr.mxu0 0.0
    %1331 = vmatpush1.xpose.msra.mxu0 0.0
    %1332 = vmatprep.subr.mxu0 0.0
    %1333 = vmatpush1.xpose.msra.mxu0 0.0
    %1334 = vmatprep.subr.mxu0 0.0
    %1335 = vmatpush1.xpose.msra.mxu0 0.0
    %1336 = vmatprep.subr.mxu0 0.0
    %1337 = vmatpush1.xpose.msra.mxu0 0.0
    %1338 = vmatprep.subr.mxu0 0.0
    %1339 = vmatpush1.xpose.msra.mxu0 0.0
    %1340 = vmatprep.subr.mxu0 0.0
    %1341 = vmatpush1.xpose.msra.mxu0 0.0
    %1342 = vmatprep.subr.mxu0 0.0
    %1343 = vmatpush1.xpose.msra.mxu0 0.0
    %1344 = vmatprep.subr.mxu0 0.0
    %1345 = vmatpush1.xpose.msra.mxu0 0.0
    %1346 = vmatprep.subr.mxu0 0.0
    %1347 = vmatpush1.xpose.msra.mxu0 0.0
    %1348 = vmatprep.subr.mxu0 0.0
    %1349 = vmatpush1.xpose.msra.mxu0 0.0
    %1350 = vmatprep.subr.mxu0 0.0
    %1351 = vmatpush1.xpose.msra.mxu0 0.0
    %1352 = vmatprep.subr.mxu0 0.0
    %1353 = vmatpush1.xpose.msra.mxu0 0.0
    %1354 = vmatprep.subr.mxu0 0.0
    %1355 = vmatpush1.xpose.msra.mxu0 0.0
    %1356 = vmatprep.subr.mxu0 0.0
    %1357 = vmatpush1.xpose.msra.mxu0 0.0
    %1358 = vmatprep.subr.mxu0 0.0
    %v1359 = vand.u32 %v1168, 4294901760
    %v1360 = vsub.f32 %v1168, %v1359
    %1361 = vmatpush1.xpose.msra.mxu0 %v1360
    %1362 = vmatprep.subr.mxu0 0.0
    %1363 = vmatpush2.xpose.msra.mxu0 0.0
    %1364 = vmatprep.subr.mxu0 0.0
    %1365 = vmatpush2.xpose.msra.mxu0 0.0
    %1366 = vmatprep.subr.mxu0 0.0
    %1367 = vmatpush2.xpose.msra.mxu0 0.0
    %1368 = vmatprep.subr.mxu0 0.0
    %1369 = vmatpush2.xpose.msra.mxu0 0.0
    %1370 = vmatprep.subr.mxu0 0.0
    %1371 = vmatpush2.xpose.msra.mxu0 0.0
    %1372 = vmatprep.subr.mxu0 0.0
    %1373 = vmatpush2.xpose.msra.mxu0 0.0
    %1374 = vmatprep.subr.mxu0 0.0
    %1375 = vmatpush2.xpose.msra.mxu0 0.0
    %1376 = vmatprep.subr.mxu0 0.0
    %1377 = vmatpush2.xpose.msra.mxu0 0.0
    %1378 = vmatprep.subr.mxu0 0.0
    %1379 = vmatpush2.xpose.msra.mxu0 0.0
    %1380 = vmatprep.subr.mxu0 0.0
    %1381 = vmatpush2.xpose.msra.mxu0 0.0
    %1382 = vmatprep.subr.mxu0 0.0
    %1383 = vmatpush2.xpose.msra.mxu0 0.0
    %1384 = vmatprep.subr.mxu0 0.0
    %1385 = vmatpush2.xpose.msra.mxu0 0.0
    %1386 = vmatprep.subr.mxu0 0.0
    %1387 = vmatpush2.xpose.msra.mxu0 0.0
    %1388 = vmatprep.subr.mxu0 0.0
    %1389 = vmatpush2.xpose.msra.mxu0 0.0
    %1390 = vmatprep.subr.mxu0 0.0
    %1391 = vmatpush2.xpose.msra.mxu0 0.0
    %1392 = vmatprep.subr.mxu0 0.0
    %1393 = vmatpush2.xpose.msra.mxu0 0.0
    %1394 = vmatprep.mubr.f32.mxu0 0.0
    %v1395 = vand.u32 %v1169, 4294901760
    %v1396 = vsub.f32 %v1169, %v1395
    %1397 = vmatmul.mubr.f32.gmra.mxu0 %v1396
    %v1398 = vpop.f32.mrf.mxu0
    %v1399 = vadd.f32 %v1325, %v1398
    %v1400 = vpop.f32.mrf.mxu0
    %1401 = vdwg.mxu0
    %1402 = vmatprep.subr.mxu0 0.0
    %1403 = vmatpush1.xpose.msra.mxu0 0.0
    %1404 = vmatprep.subr.mxu0 0.0
    %1405 = vmatpush1.xpose.msra.mxu0 0.0
    %1406 = vmatprep.subr.mxu0 0.0
    %1407 = vmatpush1.xpose.msra.mxu0 0.0
    %1408 = vmatprep.subr.mxu0 0.0
    %1409 = vmatpush1.xpose.msra.mxu0 0.0
    %1410 = vmatprep.subr.mxu0 0.0
    %1411 = vmatpush1.xpose.msra.mxu0 0.0
    %1412 = vmatprep.subr.mxu0 0.0
    %1413 = vmatpush1.xpose.msra.mxu0 0.0
    %1414 = vmatprep.subr.mxu0 0.0
    %1415 = vmatpush1.xpose.msra.mxu0 0.0
    %1416 = vmatprep.subr.mxu0 0.0
    %1417 = vmatpush1.xpose.msra.mxu0 0.0
    %1418 = vmatprep.subr.mxu0 0.0
    %1419 = vmatpush1.xpose.msra.mxu0 0.0
    %1420 = vmatprep.subr.mxu0 0.0
    %1421 = vmatpush1.xpose.msra.mxu0 0.0
    %1422 = vmatprep.subr.mxu0 0.0
    %1423 = vmatpush1.xpose.msra.mxu0 0.0
    %1424 = vmatprep.subr.mxu0 0.0
    %1425 = vmatpush1.xpose.msra.mxu0 0.0
    %1426 = vmatprep.subr.mxu0 0.0
    %1427 = vmatpush1.xpose.msra.mxu0 0.0
    %1428 = vmatprep.subr.mxu0 0.0
    %1429 = vmatpush1.xpose.msra.mxu0 0.0
    %1430 = vmatprep.subr.mxu0 0.0
    %1431 = vmatpush1.xpose.msra.mxu0 0.0
    %1432 = vmatprep.subr.mxu0 0.0
    %v1433 = vand.u32 %v1168, 4294901760
    %1434 = vmatpush1.xpose.msra.mxu0 %v1433
    %1435 = vmatprep.subr.mxu0 0.0
    %1436 = vmatpush2.xpose.msra.mxu0 0.0
    %1437 = vmatprep.subr.mxu0 0.0
    %1438 = vmatpush2.xpose.msra.mxu0 0.0
    %1439 = vmatprep.subr.mxu0 0.0
    %1440 = vmatpush2.xpose.msra.mxu0 0.0
    %1441 = vmatprep.subr.mxu0 0.0
    %1442 = vmatpush2.xpose.msra.mxu0 0.0
    %1443 = vmatprep.subr.mxu0 0.0
    %1444 = vmatpush2.xpose.msra.mxu0 0.0
    %1445 = vmatprep.subr.mxu0 0.0
    %1446 = vmatpush2.xpose.msra.mxu0 0.0
    %1447 = vmatprep.subr.mxu0 0.0
    %1448 = vmatpush2.xpose.msra.mxu0 0.0
    %1449 = vmatprep.subr.mxu0 0.0
    %1450 = vmatpush2.xpose.msra.mxu0 0.0
    %1451 = vmatprep.subr.mxu0 0.0
    %1452 = vmatpush2.xpose.msra.mxu0 0.0
    %1453 = vmatprep.subr.mxu0 0.0
    %1454 = vmatpush2.xpose.msra.mxu0 0.0
    %1455 = vmatprep.subr.mxu0 0.0
    %1456 = vmatpush2.xpose.msra.mxu0 0.0
    %1457 = vmatprep.subr.mxu0 0.0
    %1458 = vmatpush2.xpose.msra.mxu0 0.0
    %1459 = vmatprep.subr.mxu0 0.0
    %1460 = vmatpush2.xpose.msra.mxu0 0.0
    %1461 = vmatprep.subr.mxu0 0.0
    %1462 = vmatpush2.xpose.msra.mxu0 0.0
    %1463 = vmatprep.subr.mxu0 0.0
    %1464 = vmatpush2.xpose.msra.mxu0 0.0
    %1465 = vmatprep.subr.mxu0 0.0
    %1466 = vmatpush2.xpose.msra.mxu0 0.0
    %1467 = vmatprep.mubr.f32.mxu0 0.0
    %v1468 = vand.u32 %v1169, 4294901760
    %v1469 = vsub.f32 %v1169, %v1468
    %v1470 = vand.u32 %v1469, 4294901760
    %1471 = vmatmul.mubr.f32.gmra.mxu0 %v1470
    %v1472 = vpop.f32.mrf.mxu0
    %v1473 = vadd.f32 %v1399, %v1472
    %v1474 = vpop.f32.mrf.mxu0
    %1475 = vdwg.mxu0
    %1476 = vmatprep.subr.mxu0 0.0
    %1477 = vmatpush1.xpose.msra.mxu0 0.0
    %1478 = vmatprep.subr.mxu0 0.0
    %1479 = vmatpush1.xpose.msra.mxu0 0.0
    %1480 = vmatprep.subr.mxu0 0.0
    %1481 = vmatpush1.xpose.msra.mxu0 0.0
    %1482 = vmatprep.subr.mxu0 0.0
    %1483 = vmatpush1.xpose.msra.mxu0 0.0
    %1484 = vmatprep.subr.mxu0 0.0
    %1485 = vmatpush1.xpose.msra.mxu0 0.0
    %1486 = vmatprep.subr.mxu0 0.0
    %1487 = vmatpush1.xpose.msra.mxu0 0.0
    %1488 = vmatprep.subr.mxu0 0.0
    %1489 = vmatpush1.xpose.msra.mxu0 0.0
    %1490 = vmatprep.subr.mxu0 0.0
    %1491 = vmatpush1.xpose.msra.mxu0 0.0
    %1492 = vmatprep.subr.mxu0 0.0
    %1493 = vmatpush1.xpose.msra.mxu0 0.0
    %1494 = vmatprep.subr.mxu0 0.0
    %1495 = vmatpush1.xpose.msra.mxu0 0.0
    %1496 = vmatprep.subr.mxu0 0.0
    %1497 = vmatpush1.xpose.msra.mxu0 0.0
    %1498 = vmatprep.subr.mxu0 0.0
    %1499 = vmatpush1.xpose.msra.mxu0 0.0
    %1500 = vmatprep.subr.mxu0 0.0
    %1501 = vmatpush1.xpose.msra.mxu0 0.0
    %1502 = vmatprep.subr.mxu0 0.0
    %1503 = vmatpush1.xpose.msra.mxu0 0.0
    %1504 = vmatprep.subr.mxu0 0.0
    %1505 = vmatpush1.xpose.msra.mxu0 0.0
    %1506 = vmatprep.subr.mxu0 0.0
    %v1507 = vand.u32 %v1168, 4294901760
    %v1508 = vsub.f32 %v1168, %v1507
    %v1509 = vand.u32 %v1508, 4294901760
    %1510 = vmatpush1.xpose.msra.mxu0 %v1509
    %1511 = vmatprep.subr.mxu0 0.0
    %1512 = vmatpush2.xpose.msra.mxu0 0.0
    %1513 = vmatprep.subr.mxu0 0.0
    %1514 = vmatpush2.xpose.msra.mxu0 0.0
    %1515 = vmatprep.subr.mxu0 0.0
    %1516 = vmatpush2.xpose.msra.mxu0 0.0
    %1517 = vmatprep.subr.mxu0 0.0
    %1518 = vmatpush2.xpose.msra.mxu0 0.0
    %1519 = vmatprep.subr.mxu0 0.0
    %1520 = vmatpush2.xpose.msra.mxu0 0.0
    %1521 = vmatprep.subr.mxu0 0.0
    %1522 = vmatpush2.xpose.msra.mxu0 0.0
    %1523 = vmatprep.subr.mxu0 0.0
    %1524 = vmatpush2.xpose.msra.mxu0 0.0
    %1525 = vmatprep.subr.mxu0 0.0
    %1526 = vmatpush2.xpose.msra.mxu0 0.0
    %1527 = vmatprep.subr.mxu0 0.0
    %1528 = vmatpush2.xpose.msra.mxu0 0.0
    %1529 = vmatprep.subr.mxu0 0.0
    %1530 = vmatpush2.xpose.msra.mxu0 0.0
    %1531 = vmatprep.subr.mxu0 0.0
    %1532 = vmatpush2.xpose.msra.mxu0 0.0
    %1533 = vmatprep.subr.mxu0 0.0
    %1534 = vmatpush2.xpose.msra.mxu0 0.0
    %1535 = vmatprep.subr.mxu0 0.0
    %1536 = vmatpush2.xpose.msra.mxu0 0.0
    %1537 = vmatprep.subr.mxu0 0.0
    %1538 = vmatpush2.xpose.msra.mxu0 0.0
    %1539 = vmatprep.subr.mxu0 0.0
    %1540 = vmatpush2.xpose.msra.mxu0 0.0
    %1541 = vmatprep.subr.mxu0 0.0
    %1542 = vmatpush2.xpose.msra.mxu0 0.0
    %1543 = vmatprep.mubr.f32.mxu0 0.0
    %v1544 = vand.u32 %v1169, 4294901760
    %1545 = vmatmul.mubr.f32.gmra.mxu0 %v1544
    %v1546 = vpop.f32.mrf.mxu0
    %v1547 = vadd.f32 %v1473, %v1546
    %v1548 = vpop.f32.mrf.mxu0
    %1549 = vdwg.mxu0
    %1550 = vmatprep.subr.mxu0 0.0
    %1551 = vmatpush1.xpose.msra.mxu0 0.0
    %1552 = vmatprep.subr.mxu0 0.0
    %1553 = vmatpush1.xpose.msra.mxu0 0.0
    %1554 = vmatprep.subr.mxu0 0.0
    %1555 = vmatpush1.xpose.msra.mxu0 0.0
    %1556 = vmatprep.subr.mxu0 0.0
    %1557 = vmatpush1.xpose.msra.mxu0 0.0
    %1558 = vmatprep.subr.mxu0 0.0
    %1559 = vmatpush1.xpose.msra.mxu0 0.0
    %1560 = vmatprep.subr.mxu0 0.0
    %1561 = vmatpush1.xpose.msra.mxu0 0.0
    %1562 = vmatprep.subr.mxu0 0.0
    %1563 = vmatpush1.xpose.msra.mxu0 0.0
    %1564 = vmatprep.subr.mxu0 0.0
    %1565 = vmatpush1.xpose.msra.mxu0 0.0
    %1566 = vmatprep.subr.mxu0 0.0
    %1567 = vmatpush1.xpose.msra.mxu0 0.0
    %1568 = vmatprep.subr.mxu0 0.0
    %1569 = vmatpush1.xpose.msra.mxu0 0.0
    %1570 = vmatprep.subr.mxu0 0.0
    %1571 = vmatpush1.xpose.msra.mxu0 0.0
    %1572 = vmatprep.subr.mxu0 0.0
    %1573 = vmatpush1.xpose.msra.mxu0 0.0
    %1574 = vmatprep.subr.mxu0 0.0
    %1575 = vmatpush1.xpose.msra.mxu0 0.0
    %1576 = vmatprep.subr.mxu0 0.0
    %1577 = vmatpush1.xpose.msra.mxu0 0.0
    %1578 = vmatprep.subr.mxu0 0.0
    %1579 = vmatpush1.xpose.msra.mxu0 0.0
    %1580 = vmatprep.subr.mxu0 0.0
    %v1581 = vand.u32 %v1168, 4294901760
    %1582 = vmatpush1.xpose.msra.mxu0 %v1581
    %1583 = vmatprep.subr.mxu0 0.0
    %1584 = vmatpush2.xpose.msra.mxu0 0.0
    %1585 = vmatprep.subr.mxu0 0.0
    %1586 = vmatpush2.xpose.msra.mxu0 0.0
    %1587 = vmatprep.subr.mxu0 0.0
    %1588 = vmatpush2.xpose.msra.mxu0 0.0
    %1589 = vmatprep.subr.mxu0 0.0
    %1590 = vmatpush2.xpose.msra.mxu0 0.0
    %1591 = vmatprep.subr.mxu0 0.0
    %1592 = vmatpush2.xpose.msra.mxu0 0.0
    %1593 = vmatprep.subr.mxu0 0.0
    %1594 = vmatpush2.xpose.msra.mxu0 0.0
    %1595 = vmatprep.subr.mxu0 0.0
    %1596 = vmatpush2.xpose.msra.mxu0 0.0
    %1597 = vmatprep.subr.mxu0 0.0
    %1598 = vmatpush2.xpose.msra.mxu0 0.0
    %1599 = vmatprep.subr.mxu0 0.0
    %1600 = vmatpush2.xpose.msra.mxu0 0.0
    %1601 = vmatprep.subr.mxu0 0.0
    %1602 = vmatpush2.xpose.msra.mxu0 0.0
    %1603 = vmatprep.subr.mxu0 0.0
    %1604 = vmatpush2.xpose.msra.mxu0 0.0
    %1605 = vmatprep.subr.mxu0 0.0
    %1606 = vmatpush2.xpose.msra.mxu0 0.0
    %1607 = vmatprep.subr.mxu0 0.0
    %1608 = vmatpush2.xpose.msra.mxu0 0.0
    %1609 = vmatprep.subr.mxu0 0.0
    %1610 = vmatpush2.xpose.msra.mxu0 0.0
    %1611 = vmatprep.subr.mxu0 0.0
    %1612 = vmatpush2.xpose.msra.mxu0 0.0
    %1613 = vmatprep.subr.mxu0 0.0
    %1614 = vmatpush2.xpose.msra.mxu0 0.0
    %1615 = vmatprep.mubr.f32.mxu0 0.0
    %v1616 = vand.u32 %v1169, 4294901760
    %1617 = vmatmul.mubr.f32.gmra.mxu0 %v1616
    %v1618 = vpop.f32.mrf.mxu0
    %v1619 = vadd.f32 %v1547, %v1618
    %v1620 = vpop.f32.mrf.mxu0
    %1621 = vdwg.mxu0
    %vm1622 = vcmask 64512
    %1623 = vst.msk [vmem:[%s7] sm:$0xff] %vm1622, %v1619
    // Predicated region
    $region34: #{_lambda_.1} parent=1 // pred_check
      _
    $region35: #{_lambda_.1} parent=1 // pred_check_branch
      %1625 = sbr.rel (0) target = $region37
    $region36: #{_lambda_.1} parent=1 // pred_region
      _
    $region37: #{_lambda_.1} parent=1 // pred_fallthru
      _
    // Predicated region
    $region38: #{_lambda_.1} parent=1 // pred_check
      _
    $region39: #{_lambda_.1} parent=1 // pred_check_branch
      %1627 = sbr.rel (0) target = $region41
    $region40: #{_lambda_.1} parent=1 // pred_region
      _
    $region41: #{_lambda_.1} parent=1 // pred_fallthru
      _
    %1628 = vsyncpa [#allocation3], 1

</llo_original>
